<compile_context>
chip_gen: v7x
topology: tpu7x:2x2x1
jax: 0.10.0
libtpu: 0.0.40
codegen_flags: <defaults>
</compile_context>

<pallas_src>
import functools

import numpy as np
import jax
import jax.numpy as jnp
from jax.experimental import pallas as pl
from jax.experimental.pallas import tpu as pltpu

EPS = 1e-7          # matches safe_log(eps=1e-07)
_LANE = 128
_SUBLANE = 8


def _round_up(x, m):
    return ((x + m - 1) // m) * m


def _group_sum_rows(x, group=_SUBLANE):
    """(TM, N) -> (group, N): elementwise sum of consecutive row-groups.

    TM is a static multiple of `group`; the unrolled, tile-aligned adds run on the
    VPU only, keeping the XLU / vector-extended slot free for the MXU pushes.
    """
    tm = x.shape[0]
    acc = x[0:group, :]
    for r in range(group, tm, group):
        acc = acc + x[r:r + group, :]
    return acc


# --------------------------------------------------------------------------- #
# Pallas kernel: one STFT scale, one row-tile per grid step.                   #
# --------------------------------------------------------------------------- #
def _stft_loss_kernel(ref_fr, syn_fr, dft_ref, lin_ref, log_ref, *,
                      nfp, alpha, beta, plain_abs):
    # dft has the hann window and the 1/sqrt(n_fft) norm already folded in:
    #   [:, :nfp]  -> win * norm * cos(2*pi*n*k/s)
    #   [:, nfp:]  -> win * norm * (-sin(2*pi*n*k/s))
    dft = dft_ref[...]                                                      # (s, 2*nfp)

    spec_r = jnp.dot(ref_fr[...], dft, preferred_element_type=jnp.float32)  # (TM, 2*nfp)
    spec_s = jnp.dot(syn_fr[...], dft, preferred_element_type=jnp.float32)

    re_r, im_r = spec_r[:, :nfp], spec_r[:, nfp:]
    re_s, im_s = spec_s[:, :nfp], spec_s[:, nfp:]
    mag_r = jnp.sqrt(re_r * re_r + im_r * im_r)                             # (TM, nfp)
    mag_s = jnp.sqrt(re_s * re_s + im_s * im_s)

    if plain_abs:
        def a_abs(d):
            return jnp.abs(d)
    else:
        def a_abs(d):
            # |alpha * relu(d) + beta * min(d, 0)| ; asymmetric L1
            return jnp.abs(alpha * jnp.maximum(d, 0.0) + beta * jnp.minimum(d, 0.0))

    lin = a_abs(mag_r - mag_s)
    # One log of the ratio instead of two logs (same math, half the EUP log work).
    logd = a_abs(jnp.log((mag_r + EPS) / (mag_s + EPS)))

    # Per-step partial sums; zero-padded rows / padded frequency columns give
    # mag_r == mag_s == 0 and therefore contribute exactly 0 to both terms.
    lin_ref[0] = _group_sum_rows(lin)                                       # (8, nfp)
    log_ref[0] = _group_sum_rows(logd)


# --------------------------------------------------------------------------- #
# JAX glue: framing, DFT-matrix construction, per-scale pallas_call dispatch.  #
# --------------------------------------------------------------------------- #
def _frame_signal(x, n_fft, hop):
    """x: (B, L) -> frames (B, n_frames, n_fft) mimicking torch.stft framing."""
    pad = n_fft // 2
    xp = jnp.pad(x, ((0, 0), (pad, pad)), mode="reflect")
    n_frames = (xp.shape[1] - n_fft) // hop + 1
    idx = jnp.arange(n_frames)[:, None] * hop + jnp.arange(n_fft)[None, :]
    return xp[:, idx], n_frames
# TODO(synk): avoid the ~1/(1-overlap)x HBM blow-up of the materialized frames by
# passing the padded signal with memory_space=pl.ANY and framing in-kernel via DMA.


def _build_dft_matrix(s, nfp):
    """Fused [cos | sin] real-DFT matrix with hann window and 1/sqrt(s) folded in."""
    n = np.arange(s)
    k = np.arange(s // 2 + 1)
    ang = 2.0 * np.pi * np.outer(n, k) / s
    win = 0.5 - 0.5 * np.cos(2.0 * np.pi * n / s)        # hann, periodic=True
    norm = 1.0 / np.sqrt(s)                              # torch.stft normalized=True
    wn = (win * norm)[:, None]
    dft = np.zeros((s, 2 * nfp), np.float32)
    dft[:, :k.size] = wn * np.cos(ang)
    dft[:, nfp:nfp + k.size] = wn * (-np.sin(ang))
    return jnp.asarray(dft)


def _choose_tile_m(rows, s, nfp, dft_bufs, budget=24 * 1024 * 1024):
    """Largest row tile (multiple of 8, <=256) that keeps the pipeline inside VMEM."""
    dft_bytes = dft_bufs * s * (2 * nfp) * 4
    per_m = 2 * 2 * s * 4 + 8 * (2 * nfp) * 4    # dbl-buffered frame tiles + f32 temps
    avail = budget - dft_bytes
    tm = 256
    if avail > 0:
        tm = min(tm, max(_SUBLANE, (avail // per_m) // _SUBLANE * _SUBLANE))
    else:
        tm = _SUBLANE
    tm = min(tm, _round_up(rows, _SUBLANE))      # don't over-pad tiny inputs
    return int(max(_SUBLANE, tm))


def _scale_loss(ref, syn, s, overlap, alpha, beta):
    hop = max(1, int(s * (1 - overlap)))
    fr_ref, n_frames = _frame_signal(ref, s, hop)
    fr_syn, _ = _frame_signal(syn, s, hop)

    B = ref.shape[0]
    n_freq = s // 2 + 1
    nfp = _round_up(n_freq, _LANE)               # lane-dense frequency axis

    rows = B * n_frames
    dft_single_bytes = s * (2 * nfp) * 4
    single_buffer_dft = dft_single_bytes > (2 * 1024 * 1024)
    dft_bufs = 1 if single_buffer_dft else 2
    tile_m = _choose_tile_m(rows, s, nfp, dft_bufs)
    rows_pad = _round_up(rows, tile_m)
    num_tiles = rows_pad // tile_m

    fr_ref = fr_ref.reshape(rows, s)
    fr_syn = fr_syn.reshape(rows, s)
    if rows_pad != rows:
        zpad = jnp.zeros((rows_pad - rows, s), fr_ref.dtype)
        fr_ref = jnp.concatenate([fr_ref, zpad], axis=0)
        fr_syn = jnp.concatenate([fr_syn, zpad], axis=0)

    dft = _build_dft_matrix(s, nfp)

    plain_abs = (float(alpha) == 1.0 and float(beta) == 1.0)
    kern = functools.partial(_stft_loss_kernel, nfp=nfp,
                             alpha=float(alpha), beta=float(beta),
                             plain_abs=plain_abs)

    frame_spec = pl.BlockSpec((tile_m, s), lambda i: (i, 0))
    if single_buffer_dft:
        # Constant operand (index_map is constant): no point double-buffering it.
        dft_spec = pl.BlockSpec((s, 2 * nfp), lambda i: (0, 0),
                                pipeline_mode=pl.Buffered(1))
    else:
        dft_spec = pl.BlockSpec((s, 2 * nfp), lambda i: (0, 0))
    part_spec = pl.BlockSpec((1, _SUBLANE, nfp), lambda i: (i, 0, 0))

    vmem_est = (2 * 2 * tile_m * s * 4                     # two frame streams, dbl-buffered
                + dft_bufs * dft_single_bytes              # DFT matrix
                + 8 * tile_m * (2 * nfp) * 4)              # f32 temporaries
    cp_kwargs = dict(dimension_semantics=("parallel",))
    if vmem_est > 16 * 1024 * 1024:
        cp_kwargs["vmem_limit_bytes"] = min(
            _round_up(vmem_est * 3 // 2, 1 << 20), 64 * 1024 * 1024)
    # TODO(synk): for very large scales (e.g. 4096) the fused DFT matrix alone exceeds
    # VMEM; a frequency-axis grid split of the DFT matrix would be needed there.

    lin_part, log_part = pl.pallas_call(
        kern,
        out_shape=(jax.ShapeDtypeStruct((num_tiles, _SUBLANE, nfp), jnp.float32),
                   jax.ShapeDtypeStruct((num_tiles, _SUBLANE, nfp), jnp.float32)),
        grid_spec=pltpu.PrefetchScalarGridSpec(
            num_scalar_prefetch=0,
            grid=(num_tiles,),
            in_specs=[frame_spec, frame_spec, dft_spec],
            out_specs=[part_spec, part_spec],
        ),
        compiler_params=pltpu.CompilerParams(**cp_kwargs),
    )(fr_ref, fr_syn, dft)

    denom = float(B * n_freq * n_frames)
    return (jnp.sum(lin_part) + jnp.sum(log_part)) / denom


class RecLoss:
    """JAX/Pallas port of `rec_loss`: MS-FFT loss with lin + log spectral distance."""

    def __init__(self, scales, overlap, alpha=None, beta=None):
        self.scales = [int(s) for s in scales]
        self.overlap = float(overlap)
        if alpha is not None and beta is not None:
            self.alpha, self.beta = float(alpha), float(beta)   # asim_msfft_loss
        else:
            self.alpha, self.beta = 1.0, 1.0                    # ddsp_msfft_loss
        self._fwd = jax.jit(self._forward)

    def _forward(self, ref, synth):
        if ref.ndim == 3:
            ref = ref[..., 0]
        if synth.ndim == 3:
            synth = synth[..., 0]
        loss = jnp.float32(0.0)
        for s in self.scales:
            loss = loss + _scale_loss(ref, synth, s, self.overlap,
                                      self.alpha, self.beta)
        return loss

    def __call__(self, ref, synth):
        return self._fwd(ref, synth)


# Pure-JAX reference (uses jnp.fft.rfft) for a sanity check of the kernel.
def _ref_loss(ref, syn, scales, overlap, alpha, beta):
    total = jnp.float32(0.0)
    for s in scales:
        hop = int(s * (1 - overlap))
        fr_r, _ = _frame_signal(ref, s, hop)
        fr_s, _ = _frame_signal(syn, s, hop)
        n = np.arange(s)
        win = jnp.asarray(0.5 - 0.5 * np.cos(2.0 * np.pi * n / s), jnp.float32)
        S_r = jnp.abs(jnp.fft.rfft(fr_r * win, axis=-1)) / np.sqrt(s)
        S_s = jnp.abs(jnp.fft.rfft(fr_s * win, axis=-1)) / np.sqrt(s)

        def a_abs(d):
            return jnp.abs(alpha * jnp.maximum(d, 0.0) + beta * jnp.minimum(d, 0.0))

        total = total + a_abs(S_r - S_s).mean()
        total = total + a_abs(jnp.log(S_r + EPS) - jnp.log(S_s + EPS)).mean()
    return total


if __name__ == "__main__":
    key = jax.random.PRNGKey(0)
    k1, k2 = jax.random.split(key)

    B, L = 2, 256
    scales = [64, 32, 16]        # small scales consistent with L=256
    overlap = 0.75

    ref = jax.random.normal(k1, (B, L, 1), dtype=jnp.float32)
    synth = jax.random.normal(k2, (B, L, 1), dtype=jnp.float32)

    loss_mod = RecLoss(scales, overlap)          # alpha/beta None -> ddsp_msfft_loss
    loss = jax.block_until_ready(loss_mod(ref, synth))

    ref_val = jax.block_until_ready(
        _ref_loss(ref[..., 0], synth[..., 0], scales, overlap, 1.0, 1.0))

    assert np.isfinite(float(loss))
    np.testing.assert_allclose(float(loss), float(ref_val), rtol=5e-2, atol=1e-3)
    print("KERNEL_OK")
</pallas_src>

<mosaic_0001>
module attributes {stable_mosaic.version = 11 : i64} {
  func.func @_stft_loss_kernel(%arg0: i32, %arg1: memref<40x64xf32, #tpu.memory_space<vmem>>, %arg2: memref<40x64xf32, #tpu.memory_space<vmem>>, %arg3: memref<64x256xf32, #tpu.memory_space<vmem>>, %arg4: memref<1x8x128xf32, #tpu.memory_space<vmem>>, %arg5: memref<1x8x128xf32, #tpu.memory_space<vmem>>) attributes {dimension_semantics = [#tpu.dimension_semantics<parallel>], iteration_bounds = array<i64: 1>, scalar_prefetch = 0 : i64, scratch_operands = 0 : i64, tpu.core_type = #tpu.core_type<tc>, window_params = [{transform_indices = @transform_0, window_bounds = array<i64: 40, 64>}, {transform_indices = @transform_1, window_bounds = array<i64: 40, 64>}, {pipeline_mode = #tpu.pipeline_mode<synchronous>, transform_indices = @transform_2, window_bounds = array<i64: 64, 256>}, {transform_indices = @transform_3, window_bounds = array<i64: 1, 8, 128>}, {transform_indices = @transform_4, window_bounds = array<i64: 1, 8, 128>}]} {
    %c0 = arith.constant 0 : index
    %c0_0 = arith.constant 0 : index
    %0 = vector.load %arg3[%c0, %c0_0] : memref<64x256xf32, #tpu.memory_space<vmem>>, vector<64x256xf32>
    %c0_1 = arith.constant 0 : index
    %c0_2 = arith.constant 0 : index
    %1 = vector.load %arg1[%c0_1, %c0_2] : memref<40x64xf32, #tpu.memory_space<vmem>>, vector<40x64xf32>
    %cst = arith.constant dense<0.000000e+00> : vector<40x256xf32>
    %2 = tpu.matmul %1, %0, %cst {dimension_numbers = #tpu.dot_dimension_numbers<[1], [0], [0], [1], [0, 0, 1, 1], [], []>} : vector<40x64xf32>, vector<64x256xf32>, vector<40x256xf32> -> vector<40x256xf32>
    %c0_3 = arith.constant 0 : index
    %c0_4 = arith.constant 0 : index
    %3 = vector.load %arg2[%c0_3, %c0_4] : memref<40x64xf32, #tpu.memory_space<vmem>>, vector<40x64xf32>
    %cst_5 = arith.constant dense<0.000000e+00> : vector<40x256xf32>
    %4 = tpu.matmul %3, %0, %cst_5 {dimension_numbers = #tpu.dot_dimension_numbers<[1], [0], [0], [1], [0, 0, 1, 1], [], []>} : vector<40x64xf32>, vector<64x256xf32>, vector<40x256xf32> -> vector<40x256xf32>
    %5 = vector.extract_strided_slice %2 {offsets = [0, 0], sizes = [40, 128], strides = [1, 1]} : vector<40x256xf32> to vector<40x128xf32>
    %6 = vector.extract_strided_slice %2 {offsets = [0, 128], sizes = [40, 128], strides = [1, 1]} : vector<40x256xf32> to vector<40x128xf32>
    %7 = vector.extract_strided_slice %4 {offsets = [0, 0], sizes = [40, 128], strides = [1, 1]} : vector<40x256xf32> to vector<40x128xf32>
    %8 = vector.extract_strided_slice %4 {offsets = [0, 128], sizes = [40, 128], strides = [1, 1]} : vector<40x256xf32> to vector<40x128xf32>
    %9 = arith.mulf %5, %5 : vector<40x128xf32>
    %10 = arith.mulf %6, %6 : vector<40x128xf32>
    %11 = arith.addf %9, %10 : vector<40x128xf32>
    %12 = math.sqrt %11 : vector<40x128xf32>
    %13 = arith.mulf %7, %7 : vector<40x128xf32>
    %14 = arith.mulf %8, %8 : vector<40x128xf32>
    %15 = arith.addf %13, %14 : vector<40x128xf32>
    %16 = math.sqrt %15 : vector<40x128xf32>
    %17 = arith.subf %12, %16 : vector<40x128xf32>
    %18 = math.absf %17 : vector<40x128xf32>
    %cst_6 = arith.constant 1.000000e-07 : f32
    %19 = vector.broadcast %cst_6 : f32 to vector<40x128xf32>
    %20 = arith.addf %12, %19 : vector<40x128xf32>
    %cst_7 = arith.constant 1.000000e-07 : f32
    %21 = vector.broadcast %cst_7 : f32 to vector<40x128xf32>
    %22 = arith.addf %16, %21 : vector<40x128xf32>
    %23 = arith.divf %20, %22 : vector<40x128xf32>
    %24 = math.log %23 : vector<40x128xf32>
    %25 = math.absf %24 : vector<40x128xf32>
    %26 = vector.extract_strided_slice %18 {offsets = [0, 0], sizes = [8, 128], strides = [1, 1]} : vector<40x128xf32> to vector<8x128xf32>
    %27 = vector.extract_strided_slice %18 {offsets = [8, 0], sizes = [8, 128], strides = [1, 1]} : vector<40x128xf32> to vector<8x128xf32>
    %28 = arith.addf %26, %27 : vector<8x128xf32>
    %29 = vector.extract_strided_slice %18 {offsets = [16, 0], sizes = [8, 128], strides = [1, 1]} : vector<40x128xf32> to vector<8x128xf32>
    %30 = arith.addf %28, %29 : vector<8x128xf32>
    %31 = vector.extract_strided_slice %18 {offsets = [24, 0], sizes = [8, 128], strides = [1, 1]} : vector<40x128xf32> to vector<8x128xf32>
    %32 = arith.addf %30, %31 : vector<8x128xf32>
    %33 = vector.extract_strided_slice %18 {offsets = [32, 0], sizes = [8, 128], strides = [1, 1]} : vector<40x128xf32> to vector<8x128xf32>
    %34 = arith.addf %32, %33 : vector<8x128xf32>
    %c0_8 = arith.constant 0 : index
    %c0_9 = arith.constant 0 : index
    %c0_10 = arith.constant 0 : index
    %35 = vector.load %arg4[%c0_8, %c0_9, %c0_10] : memref<1x8x128xf32, #tpu.memory_space<vmem>>, vector<1x8x128xf32>
    %36 = vector.shape_cast %35 : vector<1x8x128xf32> to vector<8x128xf32>
    %37 = vector.shape_cast %34 : vector<8x128xf32> to vector<1x8x128xf32>
    tpu.vector_store %arg4[%c0_8, %c0_9, %c0_10], %37 {strides = array<i32>} : memref<1x8x128xf32, #tpu.memory_space<vmem>>, vector<1x8x128xf32>,
    %38 = vector.extract_strided_slice %25 {offsets = [0, 0], sizes = [8, 128], strides = [1, 1]} : vector<40x128xf32> to vector<8x128xf32>
    %39 = vector.extract_strided_slice %25 {offsets = [8, 0], sizes = [8, 128], strides = [1, 1]} : vector<40x128xf32> to vector<8x128xf32>
    %40 = arith.addf %38, %39 : vector<8x128xf32>
    %41 = vector.extract_strided_slice %25 {offsets = [16, 0], sizes = [8, 128], strides = [1, 1]} : vector<40x128xf32> to vector<8x128xf32>
    %42 = arith.addf %40, %41 : vector<8x128xf32>
    %43 = vector.extract_strided_slice %25 {offsets = [24, 0], sizes = [8, 128], strides = [1, 1]} : vector<40x128xf32> to vector<8x128xf32>
    %44 = arith.addf %42, %43 : vector<8x128xf32>
    %45 = vector.extract_strided_slice %25 {offsets = [32, 0], sizes = [8, 128], strides = [1, 1]} : vector<40x128xf32> to vector<8x128xf32>
    %46 = arith.addf %44, %45 : vector<8x128xf32>
    %c0_11 = arith.constant 0 : index
    %c0_12 = arith.constant 0 : index
    %c0_13 = arith.constant 0 : index
    %47 = vector.load %arg5[%c0_11, %c0_12, %c0_13] : memref<1x8x128xf32, #tpu.memory_space<vmem>>, vector<1x8x128xf32>
    %48 = vector.shape_cast %47 : vector<1x8x128xf32> to vector<8x128xf32>
    %49 = vector.shape_cast %46 : vector<8x128xf32> to vector<1x8x128xf32>
    tpu.vector_store %arg5[%c0_11, %c0_12, %c0_13], %49 {strides = array<i32>} : memref<1x8x128xf32, #tpu.memory_space<vmem>>, vector<1x8x128xf32>,
    return
  }
  func.func @transform_0(%arg0: i32) -> (i32, i32) {
    %c0_i32 = arith.constant 0 : i32
    %c0_i32_0 = arith.constant 0 : i32
    return %arg0, %c0_i32 : i32, i32
  }
  func.func @transform_1(%arg0: i32) -> (i32, i32) {
    %c0_i32 = arith.constant 0 : i32
    %c0_i32_0 = arith.constant 0 : i32
    return %arg0, %c0_i32 : i32, i32
  }
  func.func @transform_2(%arg0: i32) -> (i32, i32) {
    %c0_i32 = arith.constant 0 : i32
    %c0_i32_0 = arith.constant 0 : i32
    %c0_i32_1 = arith.constant 0 : i32
    return %c0_i32, %c0_i32_0 : i32, i32
  }
  func.func @transform_3(%arg0: i32) -> (i32, i32, i32) {
    %c0_i32 = arith.constant 0 : i32
    %c0_i32_0 = arith.constant 0 : i32
    %c0_i32_1 = arith.constant 0 : i32
    return %arg0, %c0_i32, %c0_i32_0 : i32, i32, i32
  }
  func.func @transform_4(%arg0: i32) -> (i32, i32, i32) {
    %c0_i32 = arith.constant 0 : i32
    %c0_i32_0 = arith.constant 0 : i32
    %c0_i32_1 = arith.constant 0 : i32
    return %arg0, %c0_i32, %c0_i32_0 : i32, i32, i32
  }
}

module attributes {stable_mosaic.version = 11 : i64} {
  func.func @_stft_loss_kernel(%arg0: i32, %arg1: memref<72x32xf32, #tpu.memory_space<vmem>>, %arg2: memref<72x32xf32, #tpu.memory_space<vmem>>, %arg3: memref<32x256xf32, #tpu.memory_space<vmem>>, %arg4: memref<1x8x128xf32, #tpu.memory_space<vmem>>, %arg5: memref<1x8x128xf32, #tpu.memory_space<vmem>>) attributes {dimension_semantics = [#tpu.dimension_semantics<parallel>], iteration_bounds = array<i64: 1>, scalar_prefetch = 0 : i64, scratch_operands = 0 : i64, tpu.core_type = #tpu.core_type<tc>, window_params = [{transform_indices = @transform_0, window_bounds = array<i64: 72, 32>}, {transform_indices = @transform_1, window_bounds = array<i64: 72, 32>}, {pipeline_mode = #tpu.pipeline_mode<synchronous>, transform_indices = @transform_2, window_bounds = array<i64: 32, 256>}, {transform_indices = @transform_3, window_bounds = array<i64: 1, 8, 128>}, {transform_indices = @transform_4, window_bounds = array<i64: 1, 8, 128>}]} {
    %c0 = arith.constant 0 : index
    %c0_0 = arith.constant 0 : index
    %0 = vector.load %arg3[%c0, %c0_0] : memref<32x256xf32, #tpu.memory_space<vmem>>, vector<32x256xf32>
    %c0_1 = arith.constant 0 : index
    %c0_2 = arith.constant 0 : index
    %1 = vector.load %arg1[%c0_1, %c0_2] : memref<72x32xf32, #tpu.memory_space<vmem>>, vector<72x32xf32>
    %cst = arith.constant dense<0.000000e+00> : vector<72x256xf32>
    %2 = tpu.matmul %1, %0, %cst {dimension_numbers = #tpu.dot_dimension_numbers<[1], [0], [0], [1], [0, 0, 1, 1], [], []>} : vector<72x32xf32>, vector<32x256xf32>, vector<72x256xf32> -> vector<72x256xf32>
    %c0_3 = arith.constant 0 : index
    %c0_4 = arith.constant 0 : index
    %3 = vector.load %arg2[%c0_3, %c0_4] : memref<72x32xf32, #tpu.memory_space<vmem>>, vector<72x32xf32>
    %cst_5 = arith.constant dense<0.000000e+00> : vector<72x256xf32>
    %4 = tpu.matmul %3, %0, %cst_5 {dimension_numbers = #tpu.dot_dimension_numbers<[1], [0], [0], [1], [0, 0, 1, 1], [], []>} : vector<72x32xf32>, vector<32x256xf32>, vector<72x256xf32> -> vector<72x256xf32>
    %5 = vector.extract_strided_slice %2 {offsets = [0, 0], sizes = [72, 128], strides = [1, 1]} : vector<72x256xf32> to vector<72x128xf32>
    %6 = vector.extract_strided_slice %2 {offsets = [0, 128], sizes = [72, 128], strides = [1, 1]} : vector<72x256xf32> to vector<72x128xf32>
    %7 = vector.extract_strided_slice %4 {offsets = [0, 0], sizes = [72, 128], strides = [1, 1]} : vector<72x256xf32> to vector<72x128xf32>
    %8 = vector.extract_strided_slice %4 {offsets = [0, 128], sizes = [72, 128], strides = [1, 1]} : vector<72x256xf32> to vector<72x128xf32>
    %9 = arith.mulf %5, %5 : vector<72x128xf32>
    %10 = arith.mulf %6, %6 : vector<72x128xf32>
    %11 = arith.addf %9, %10 : vector<72x128xf32>
    %12 = math.sqrt %11 : vector<72x128xf32>
    %13 = arith.mulf %7, %7 : vector<72x128xf32>
    %14 = arith.mulf %8, %8 : vector<72x128xf32>
    %15 = arith.addf %13, %14 : vector<72x128xf32>
    %16 = math.sqrt %15 : vector<72x128xf32>
    %17 = arith.subf %12, %16 : vector<72x128xf32>
    %18 = math.absf %17 : vector<72x128xf32>
    %cst_6 = arith.constant 1.000000e-07 : f32
    %19 = vector.broadcast %cst_6 : f32 to vector<72x128xf32>
    %20 = arith.addf %12, %19 : vector<72x128xf32>
    %cst_7 = arith.constant 1.000000e-07 : f32
    %21 = vector.broadcast %cst_7 : f32 to vector<72x128xf32>
    %22 = arith.addf %16, %21 : vector<72x128xf32>
    %23 = arith.divf %20, %22 : vector<72x128xf32>
    %24 = math.log %23 : vector<72x128xf32>
    %25 = math.absf %24 : vector<72x128xf32>
    %26 = vector.extract_strided_slice %18 {offsets = [0, 0], sizes = [8, 128], strides = [1, 1]} : vector<72x128xf32> to vector<8x128xf32>
    %27 = vector.extract_strided_slice %18 {offsets = [8, 0], sizes = [8, 128], strides = [1, 1]} : vector<72x128xf32> to vector<8x128xf32>
    %28 = arith.addf %26, %27 : vector<8x128xf32>
    %29 = vector.extract_strided_slice %18 {offsets = [16, 0], sizes = [8, 128], strides = [1, 1]} : vector<72x128xf32> to vector<8x128xf32>
    %30 = arith.addf %28, %29 : vector<8x128xf32>
    %31 = vector.extract_strided_slice %18 {offsets = [24, 0], sizes = [8, 128], strides = [1, 1]} : vector<72x128xf32> to vector<8x128xf32>
    %32 = arith.addf %30, %31 : vector<8x128xf32>
    %33 = vector.extract_strided_slice %18 {offsets = [32, 0], sizes = [8, 128], strides = [1, 1]} : vector<72x128xf32> to vector<8x128xf32>
    %34 = arith.addf %32, %33 : vector<8x128xf32>
    %35 = vector.extract_strided_slice %18 {offsets = [40, 0], sizes = [8, 128], strides = [1, 1]} : vector<72x128xf32> to vector<8x128xf32>
    %36 = arith.addf %34, %35 : vector<8x128xf32>
    %37 = vector.extract_strided_slice %18 {offsets = [48, 0], sizes = [8, 128], strides = [1, 1]} : vector<72x128xf32> to vector<8x128xf32>
    %38 = arith.addf %36, %37 : vector<8x128xf32>
    %39 = vector.extract_strided_slice %18 {offsets = [56, 0], sizes = [8, 128], strides = [1, 1]} : vector<72x128xf32> to vector<8x128xf32>
    %40 = arith.addf %38, %39 : vector<8x128xf32>
    %41 = vector.extract_strided_slice %18 {offsets = [64, 0], sizes = [8, 128], strides = [1, 1]} : vector<72x128xf32> to vector<8x128xf32>
    %42 = arith.addf %40, %41 : vector<8x128xf32>
    %c0_8 = arith.constant 0 : index
    %c0_9 = arith.constant 0 : index
    %c0_10 = arith.constant 0 : index
    %43 = vector.load %arg4[%c0_8, %c0_9, %c0_10] : memref<1x8x128xf32, #tpu.memory_space<vmem>>, vector<1x8x128xf32>
    %44 = vector.shape_cast %43 : vector<1x8x128xf32> to vector<8x128xf32>
    %45 = vector.shape_cast %42 : vector<8x128xf32> to vector<1x8x128xf32>
    tpu.vector_store %arg4[%c0_8, %c0_9, %c0_10], %45 {strides = array<i32>} : memref<1x8x128xf32, #tpu.memory_space<vmem>>, vector<1x8x128xf32>,
    %46 = vector.extract_strided_slice %25 {offsets = [0, 0], sizes = [8, 128], strides = [1, 1]} : vector<72x128xf32> to vector<8x128xf32>
    %47 = vector.extract_strided_slice %25 {offsets = [8, 0], sizes = [8, 128], strides = [1, 1]} : vector<72x128xf32> to vector<8x128xf32>
    %48 = arith.addf %46, %47 : vector<8x128xf32>
    %49 = vector.extract_strided_slice %25 {offsets = [16, 0], sizes = [8, 128], strides = [1, 1]} : vector<72x128xf32> to vector<8x128xf32>
    %50 = arith.addf %48, %49 : vector<8x128xf32>
    %51 = vector.extract_strided_slice %25 {offsets = [24, 0], sizes = [8, 128], strides = [1, 1]} : vector<72x128xf32> to vector<8x128xf32>
    %52 = arith.addf %50, %51 : vector<8x128xf32>
    %53 = vector.extract_strided_slice %25 {offsets = [32, 0], sizes = [8, 128], strides = [1, 1]} : vector<72x128xf32> to vector<8x128xf32>
    %54 = arith.addf %52, %53 : vector<8x128xf32>
    %55 = vector.extract_strided_slice %25 {offsets = [40, 0], sizes = [8, 128], strides = [1, 1]} : vector<72x128xf32> to vector<8x128xf32>
    %56 = arith.addf %54, %55 : vector<8x128xf32>
    %57 = vector.extract_strided_slice %25 {offsets = [48, 0], sizes = [8, 128], strides = [1, 1]} : vector<72x128xf32> to vector<8x128xf32>
    %58 = arith.addf %56, %57 : vector<8x128xf32>
    %59 = vector.extract_strided_slice %25 {offsets = [56, 0], sizes = [8, 128], strides = [1, 1]} : vector<72x128xf32> to vector<8x128xf32>
    %60 = arith.addf %58, %59 : vector<8x128xf32>
    %61 = vector.extract_strided_slice %25 {offsets = [64, 0], sizes = [8, 128], strides = [1, 1]} : vector<72x128xf32> to vector<8x128xf32>
    %62 = arith.addf %60, %61 : vector<8x128xf32>
    %c0_11 = arith.constant 0 : index
    %c0_12 = arith.constant 0 : index
    %c0_13 = arith.constant 0 : index
    %63 = vector.load %arg5[%c0_11, %c0_12, %c0_13] : memref<1x8x128xf32, #tpu.memory_space<vmem>>, vector<1x8x128xf32>
    %64 = vector.shape_cast %63 : vector<1x8x128xf32> to vector<8x128xf32>
    %65 = vector.shape_cast %62 : vector<8x128xf32> to vector<1x8x128xf32>
    tpu.vector_store %arg5[%c0_11, %c0_12, %c0_13], %65 {strides = array<i32>} : memref<1x8x128xf32, #tpu.memory_space<vmem>>, vector<1x8x128xf32>,
    return
  }
  func.func @transform_0(%arg0: i32) -> (i32, i32) {
    %c0_i32 = arith.constant 0 : i32
    %c0_i32_0 = arith.constant 0 : i32
    return %arg0, %c0_i32 : i32, i32
  }
  func.func @transform_1(%arg0: i32) -> (i32, i32) {
    %c0_i32 = arith.constant 0 : i32
    %c0_i32_0 = arith.constant 0 : i32
    return %arg0, %c0_i32 : i32, i32
  }
  func.func @transform_2(%arg0: i32) -> (i32, i32) {
    %c0_i32 = arith.constant 0 : i32
    %c0_i32_0 = arith.constant 0 : i32
    %c0_i32_1 = arith.constant 0 : i32
    return %c0_i32, %c0_i32_0 : i32, i32
  }
  func.func @transform_3(%arg0: i32) -> (i32, i32, i32) {
    %c0_i32 = arith.constant 0 : i32
    %c0_i32_0 = arith.constant 0 : i32
    %c0_i32_1 = arith.constant 0 : i32
    return %arg0, %c0_i32, %c0_i32_0 : i32, i32, i32
  }
  func.func @transform_4(%arg0: i32) -> (i32, i32, i32) {
    %c0_i32 = arith.constant 0 : i32
    %c0_i32_0 = arith.constant 0 : i32
    %c0_i32_1 = arith.constant 0 : i32
    return %arg0, %c0_i32, %c0_i32_0 : i32, i32, i32
  }
}

module attributes {stable_mosaic.version = 11 : i64} {
  func.func @_stft_loss_kernel(%arg0: i32, %arg1: memref<136x16xf32, #tpu.memory_space<vmem>>, %arg2: memref<136x16xf32, #tpu.memory_space<vmem>>, %arg3: memref<16x256xf32, #tpu.memory_space<vmem>>, %arg4: memref<1x8x128xf32, #tpu.memory_space<vmem>>, %arg5: memref<1x8x128xf32, #tpu.memory_space<vmem>>) attributes {dimension_semantics = [#tpu.dimension_semantics<parallel>], iteration_bounds = array<i64: 1>, scalar_prefetch = 0 : i64, scratch_operands = 0 : i64, tpu.core_type = #tpu.core_type<tc>, window_params = [{transform_indices = @transform_0, window_bounds = array<i64: 136, 16>}, {transform_indices = @transform_1, window_bounds = array<i64: 136, 16>}, {pipeline_mode = #tpu.pipeline_mode<synchronous>, transform_indices = @transform_2, window_bounds = array<i64: 16, 256>}, {transform_indices = @transform_3, window_bounds = array<i64: 1, 8, 128>}, {transform_indices = @transform_4, window_bounds = array<i64: 1, 8, 128>}]} {
    %c0 = arith.constant 0 : index
    %c0_0 = arith.constant 0 : index
    %0 = vector.load %arg3[%c0, %c0_0] : memref<16x256xf32, #tpu.memory_space<vmem>>, vector<16x256xf32>
    %c0_1 = arith.constant 0 : index
    %c0_2 = arith.constant 0 : index
    %1 = vector.load %arg1[%c0_1, %c0_2] : memref<136x16xf32, #tpu.memory_space<vmem>>, vector<136x16xf32>
    %cst = arith.constant dense<0.000000e+00> : vector<136x256xf32>
    %2 = tpu.matmul %1, %0, %cst {dimension_numbers = #tpu.dot_dimension_numbers<[1], [0], [0], [1], [0, 0, 1, 1], [], []>} : vector<136x16xf32>, vector<16x256xf32>, vector<136x256xf32> -> vector<136x256xf32>
    %c0_3 = arith.constant 0 : index
    %c0_4 = arith.constant 0 : index
    %3 = vector.load %arg2[%c0_3, %c0_4] : memref<136x16xf32, #tpu.memory_space<vmem>>, vector<136x16xf32>
    %cst_5 = arith.constant dense<0.000000e+00> : vector<136x256xf32>
    %4 = tpu.matmul %3, %0, %cst_5 {dimension_numbers = #tpu.dot_dimension_numbers<[1], [0], [0], [1], [0, 0, 1, 1], [], []>} : vector<136x16xf32>, vector<16x256xf32>, vector<136x256xf32> -> vector<136x256xf32>
    %5 = vector.extract_strided_slice %2 {offsets = [0, 0], sizes = [136, 128], strides = [1, 1]} : vector<136x256xf32> to vector<136x128xf32>
    %6 = vector.extract_strided_slice %2 {offsets = [0, 128], sizes = [136, 128], strides = [1, 1]} : vector<136x256xf32> to vector<136x128xf32>
    %7 = vector.extract_strided_slice %4 {offsets = [0, 0], sizes = [136, 128], strides = [1, 1]} : vector<136x256xf32> to vector<136x128xf32>
    %8 = vector.extract_strided_slice %4 {offsets = [0, 128], sizes = [136, 128], strides = [1, 1]} : vector<136x256xf32> to vector<136x128xf32>
    %9 = arith.mulf %5, %5 : vector<136x128xf32>
    %10 = arith.mulf %6, %6 : vector<136x128xf32>
    %11 = arith.addf %9, %10 : vector<136x128xf32>
    %12 = math.sqrt %11 : vector<136x128xf32>
    %13 = arith.mulf %7, %7 : vector<136x128xf32>
    %14 = arith.mulf %8, %8 : vector<136x128xf32>
    %15 = arith.addf %13, %14 : vector<136x128xf32>
    %16 = math.sqrt %15 : vector<136x128xf32>
    %17 = arith.subf %12, %16 : vector<136x128xf32>
    %18 = math.absf %17 : vector<136x128xf32>
    %cst_6 = arith.constant 1.000000e-07 : f32
    %19 = vector.broadcast %cst_6 : f32 to vector<136x128xf32>
    %20 = arith.addf %12, %19 : vector<136x128xf32>
    %cst_7 = arith.constant 1.000000e-07 : f32
    %21 = vector.broadcast %cst_7 : f32 to vector<136x128xf32>
    %22 = arith.addf %16, %21 : vector<136x128xf32>
    %23 = arith.divf %20, %22 : vector<136x128xf32>
    %24 = math.log %23 : vector<136x128xf32>
    %25 = math.absf %24 : vector<136x128xf32>
    %26 = vector.extract_strided_slice %18 {offsets = [0, 0], sizes = [8, 128], strides = [1, 1]} : vector<136x128xf32> to vector<8x128xf32>
    %27 = vector.extract_strided_slice %18 {offsets = [8, 0], sizes = [8, 128], strides = [1, 1]} : vector<136x128xf32> to vector<8x128xf32>
    %28 = arith.addf %26, %27 : vector<8x128xf32>
    %29 = vector.extract_strided_slice %18 {offsets = [16, 0], sizes = [8, 128], strides = [1, 1]} : vector<136x128xf32> to vector<8x128xf32>
    %30 = arith.addf %28, %29 : vector<8x128xf32>
    %31 = vector.extract_strided_slice %18 {offsets = [24, 0], sizes = [8, 128], strides = [1, 1]} : vector<136x128xf32> to vector<8x128xf32>
    %32 = arith.addf %30, %31 : vector<8x128xf32>
    %33 = vector.extract_strided_slice %18 {offsets = [32, 0], sizes = [8, 128], strides = [1, 1]} : vector<136x128xf32> to vector<8x128xf32>
    %34 = arith.addf %32, %33 : vector<8x128xf32>
    %35 = vector.extract_strided_slice %18 {offsets = [40, 0], sizes = [8, 128], strides = [1, 1]} : vector<136x128xf32> to vector<8x128xf32>
    %36 = arith.addf %34, %35 : vector<8x128xf32>
    %37 = vector.extract_strided_slice %18 {offsets = [48, 0], sizes = [8, 128], strides = [1, 1]} : vector<136x128xf32> to vector<8x128xf32>
    %38 = arith.addf %36, %37 : vector<8x128xf32>
    %39 = vector.extract_strided_slice %18 {offsets = [56, 0], sizes = [8, 128], strides = [1, 1]} : vector<136x128xf32> to vector<8x128xf32>
    %40 = arith.addf %38, %39 : vector<8x128xf32>
    %41 = vector.extract_strided_slice %18 {offsets = [64, 0], sizes = [8, 128], strides = [1, 1]} : vector<136x128xf32> to vector<8x128xf32>
    %42 = arith.addf %40, %41 : vector<8x128xf32>
    %43 = vector.extract_strided_slice %18 {offsets = [72, 0], sizes = [8, 128], strides = [1, 1]} : vector<136x128xf32> to vector<8x128xf32>
    %44 = arith.addf %42, %43 : vector<8x128xf32>
    %45 = vector.extract_strided_slice %18 {offsets = [80, 0], sizes = [8, 128], strides = [1, 1]} : vector<136x128xf32> to vector<8x128xf32>
    %46 = arith.addf %44, %45 : vector<8x128xf32>
    %47 = vector.extract_strided_slice %18 {offsets = [88, 0], sizes = [8, 128], strides = [1, 1]} : vector<136x128xf32> to vector<8x128xf32>
    %48 = arith.addf %46, %47 : vector<8x128xf32>
    %49 = vector.extract_strided_slice %18 {offsets = [96, 0], sizes = [8, 128], strides = [1, 1]} : vector<136x128xf32> to vector<8x128xf32>
    %50 = arith.addf %48, %49 : vector<8x128xf32>
    %51 = vector.extract_strided_slice %18 {offsets = [104, 0], sizes = [8, 128], strides = [1, 1]} : vector<136x128xf32> to vector<8x128xf32>
    %52 = arith.addf %50, %51 : vector<8x128xf32>
    %53 = vector.extract_strided_slice %18 {offsets = [112, 0], sizes = [8, 128], strides = [1, 1]} : vector<136x128xf32> to vector<8x128xf32>
    %54 = arith.addf %52, %53 : vector<8x128xf32>
    %55 = vector.extract_strided_slice %18 {offsets = [120, 0], sizes = [8, 128], strides = [1, 1]} : vector<136x128xf32> to vector<8x128xf32>
    %56 = arith.addf %54, %55 : vector<8x128xf32>
    %57 = vector.extract_strided_slice %18 {offsets = [128, 0], sizes = [8, 128], strides = [1, 1]} : vector<136x128xf32> to vector<8x128xf32>
    %58 = arith.addf %56, %57 : vector<8x128xf32>
    %c0_8 = arith.constant 0 : index
    %c0_9 = arith.constant 0 : index
    %c0_10 = arith.constant 0 : index
    %59 = vector.load %arg4[%c0_8, %c0_9, %c0_10] : memref<1x8x128xf32, #tpu.memory_space<vmem>>, vector<1x8x128xf32>
    %60 = vector.shape_cast %59 : vector<1x8x128xf32> to vector<8x128xf32>
    %61 = vector.shape_cast %58 : vector<8x128xf32> to vector<1x8x128xf32>
    tpu.vector_store %arg4[%c0_8, %c0_9, %c0_10], %61 {strides = array<i32>} : memref<1x8x128xf32, #tpu.memory_space<vmem>>, vector<1x8x128xf32>,
    %62 = vector.extract_strided_slice %25 {offsets = [0, 0], sizes = [8, 128], strides = [1, 1]} : vector<136x128xf32> to vector<8x128xf32>
    %63 = vector.extract_strided_slice %25 {offsets = [8, 0], sizes = [8, 128], strides = [1, 1]} : vector<136x128xf32> to vector<8x128xf32>
    %64 = arith.addf %62, %63 : vector<8x128xf32>
    %65 = vector.extract_strided_slice %25 {offsets = [16, 0], sizes = [8, 128], strides = [1, 1]} : vector<136x128xf32> to vector<8x128xf32>
    %66 = arith.addf %64, %65 : vector<8x128xf32>
    %67 = vector.extract_strided_slice %25 {offsets = [24, 0], sizes = [8, 128], strides = [1, 1]} : vector<136x128xf32> to vector<8x128xf32>
    %68 = arith.addf %66, %67 : vector<8x128xf32>
    %69 = vector.extract_strided_slice %25 {offsets = [32, 0], sizes = [8, 128], strides = [1, 1]} : vector<136x128xf32> to vector<8x128xf32>
    %70 = arith.addf %68, %69 : vector<8x128xf32>
    %71 = vector.extract_strided_slice %25 {offsets = [40, 0], sizes = [8, 128], strides = [1, 1]} : vector<136x128xf32> to vector<8x128xf32>
    %72 = arith.addf %70, %71 : vector<8x128xf32>
    %73 = vector.extract_strided_slice %25 {offsets = [48, 0], sizes = [8, 128], strides = [1, 1]} : vector<136x128xf32> to vector<8x128xf32>
    %74 = arith.addf %72, %73 : vector<8x128xf32>
    %75 = vector.extract_strided_slice %25 {offsets = [56, 0], sizes = [8, 128], strides = [1, 1]} : vector<136x128xf32> to vector<8x128xf32>
    %76 = arith.addf %74, %75 : vector<8x128xf32>
    %77 = vector.extract_strided_slice %25 {offsets = [64, 0], sizes = [8, 128], strides = [1, 1]} : vector<136x128xf32> to vector<8x128xf32>
    %78 = arith.addf %76, %77 : vector<8x128xf32>
    %79 = vector.extract_strided_slice %25 {offsets = [72, 0], sizes = [8, 128], strides = [1, 1]} : vector<136x128xf32> to vector<8x128xf32>
    %80 = arith.addf %78, %79 : vector<8x128xf32>
    %81 = vector.extract_strided_slice %25 {offsets = [80, 0], sizes = [8, 128], strides = [1, 1]} : vector<136x128xf32> to vector<8x128xf32>
    %82 = arith.addf %80, %81 : vector<8x128xf32>
    %83 = vector.extract_strided_slice %25 {offsets = [88, 0], sizes = [8, 128], strides = [1, 1]} : vector<136x128xf32> to vector<8x128xf32>
    %84 = arith.addf %82, %83 : vector<8x128xf32>
    %85 = vector.extract_strided_slice %25 {offsets = [96, 0], sizes = [8, 128], strides = [1, 1]} : vector<136x128xf32> to vector<8x128xf32>
    %86 = arith.addf %84, %85 : vector<8x128xf32>
    %87 = vector.extract_strided_slice %25 {offsets = [104, 0], sizes = [8, 128], strides = [1, 1]} : vector<136x128xf32> to vector<8x128xf32>
    %88 = arith.addf %86, %87 : vector<8x128xf32>
    %89 = vector.extract_strided_slice %25 {offsets = [112, 0], sizes = [8, 128], strides = [1, 1]} : vector<136x128xf32> to vector<8x128xf32>
    %90 = arith.addf %88, %89 : vector<8x128xf32>
    %91 = vector.extract_strided_slice %25 {offsets = [120, 0], sizes = [8, 128], strides = [1, 1]} : vector<136x128xf32> to vector<8x128xf32>
    %92 = arith.addf %90, %91 : vector<8x128xf32>
    %93 = vector.extract_strided_slice %25 {offsets = [128, 0], sizes = [8, 128], strides = [1, 1]} : vector<136x128xf32> to vector<8x128xf32>
    %94 = arith.addf %92, %93 : vector<8x128xf32>
    %c0_11 = arith.constant 0 : index
    %c0_12 = arith.constant 0 : index
    %c0_13 = arith.constant 0 : index
    %95 = vector.load %arg5[%c0_11, %c0_12, %c0_13] : memref<1x8x128xf32, #tpu.memory_space<vmem>>, vector<1x8x128xf32>
    %96 = vector.shape_cast %95 : vector<1x8x128xf32> to vector<8x128xf32>
    %97 = vector.shape_cast %94 : vector<8x128xf32> to vector<1x8x128xf32>
    tpu.vector_store %arg5[%c0_11, %c0_12, %c0_13], %97 {strides = array<i32>} : memref<1x8x128xf32, #tpu.memory_space<vmem>>, vector<1x8x128xf32>,
    return
  }
  func.func @transform_0(%arg0: i32) -> (i32, i32) {
    %c0_i32 = arith.constant 0 : i32
    %c0_i32_0 = arith.constant 0 : i32
    return %arg0, %c0_i32 : i32, i32
  }
  func.func @transform_1(%arg0: i32) -> (i32, i32) {
    %c0_i32 = arith.constant 0 : i32
    %c0_i32_0 = arith.constant 0 : i32
    return %arg0, %c0_i32 : i32, i32
  }
  func.func @transform_2(%arg0: i32) -> (i32, i32) {
    %c0_i32 = arith.constant 0 : i32
    %c0_i32_0 = arith.constant 0 : i32
    %c0_i32_1 = arith.constant 0 : i32
    return %c0_i32, %c0_i32_0 : i32, i32
  }
  func.func @transform_3(%arg0: i32) -> (i32, i32, i32) {
    %c0_i32 = arith.constant 0 : i32
    %c0_i32_0 = arith.constant 0 : i32
    %c0_i32_1 = arith.constant 0 : i32
    return %arg0, %c0_i32, %c0_i32_0 : i32, i32, i32
  }
  func.func @transform_4(%arg0: i32) -> (i32, i32, i32) {
    %c0_i32 = arith.constant 0 : i32
    %c0_i32_0 = arith.constant 0 : i32
    %c0_i32_1 = arith.constant 0 : i32
    return %arg0, %c0_i32, %c0_i32_0 : i32, i32, i32
  }
}

</mosaic_0001>

<llo_original>
// kernel: _forward.3
$region0: #{_forward.3}
  #allocation0 [shape = 'u32[]', space=smem, size = 0x4, offset = 0x4, fixed_abs, tag = 'smem constant byte address 0x4 - core index']
  #allocation1 [shape = 'u32[144,128]{1,0:T(1,128)}', space=vmem, size = 0x12000, scoped, tag = 'internal scratch']
  %s0 = inlined_call_operand.vmem [shape: f32[40,64], index: 0, kind: input, shape index: {}]
  %s1 = inlined_call_operand.vmem [shape: f32[40,64], index: 1, kind: input, shape index: {}]
  %s2 = inlined_call_operand.vmem [shape: f32[64,256], index: 2, kind: input, shape index: {}]
  %s3 = inlined_call_operand.vmem [shape: f32[1,8,128], index: 3, kind: output, shape index: {0}]
  %s4 = inlined_call_operand.vmem [shape: f32[1,8,128], index: 4, kind: output, shape index: {1}]
  %5 = xla_tuple %s3, %s4
  %s6 = sld [smem:[#allocation0]]
  $region30: #{_forward.3} parent=0
    _
  %s8 = ssub.s32 1, %s6
  %s9 = scalar_select 0, %s8, %s6
  // Predicated region
  $region2: #{_forward.3} parent=0 // pred_check
    _
  $region3: #{_forward.3} parent=0 // pred_check_branch
    %11 = sbr.rel (0) target = $region5
  $region4: #{_forward.3} parent=0 // pred_region
    _
  $region5: #{_forward.3} parent=0 // pred_fallthru
    _
  // Predicated region
  $region6: #{_forward.3} parent=0 // pred_check
    _
  $region7: #{_forward.3} parent=0 // pred_check_branch
    %13 = sbr.rel (0) target = $region9
  $region8: #{_forward.3} parent=0 // pred_region
    _
  $region9: #{_forward.3} parent=0 // pred_fallthru
    _
  // Predicated region
  $region10: #{_forward.3} parent=0 // pred_check
    _
  $region11: #{_forward.3} parent=0 // pred_check_branch
    %15 = sbr.rel (0) target = $region13
  $region12: #{_forward.3} parent=0 // pred_region
    _
  $region13: #{_forward.3} parent=0 // pred_fallthru
    _
  %v16 = vld [vmem:[%s2] sm:$0xff]
  %v17 = vld [vmem:[%s2 + $0x8] sm:$0xff]
  %v18 = vld [vmem:[%s2 + $0x10] sm:$0xff]
  %v19 = vld [vmem:[%s2 + $0x18] sm:$0xff]
  %v20 = vld [vmem:[%s2 + $0x20] sm:$0xff]
  %v21 = vld [vmem:[%s2 + $0x28] sm:$0xff]
  %v22 = vld [vmem:[%s2 + $0x30] sm:$0xff]
  %v23 = vld [vmem:[%s2 + $0x38] sm:$0xff]
  %v24 = vld [vmem:[%s2 + $0x40] sm:$0xff]
  %v25 = vld [vmem:[%s2 + $0x48] sm:$0xff]
  %v26 = vld [vmem:[%s2 + $0x50] sm:$0xff]
  %v27 = vld [vmem:[%s2 + $0x58] sm:$0xff]
  %v28 = vld [vmem:[%s2 + $0x60] sm:$0xff]
  %v29 = vld [vmem:[%s2 + $0x68] sm:$0xff]
  %v30 = vld [vmem:[%s2 + $0x70] sm:$0xff]
  %v31 = vld [vmem:[%s2 + $0x78] sm:$0xff]
  %v32 = vld [vmem:[%s0] sm:$0xff]
  %v33 = vld [vmem:[%s0 + $0x8] sm:$0xff]
  %v34 = vld [vmem:[%s0 + $0x10] sm:$0xff]
  %v35 = vld [vmem:[%s0 + $0x18] sm:$0xff]
  %v36 = vld [vmem:[%s0 + $0x20] sm:$0xff]
  %vm37 = vcmask 523264
  %v39 = vsel %vm37, %v32, 0
  %v42 = vsel %vm37, %v33, 0
  %v45 = vsel %vm37, %v34, 0
  %v48 = vsel %vm37, %v35, 0
  %v51 = vsel %vm37, %v36, 0
  %53 = vmatprep.subr.mxu0 %v17
  %54 = vmatpush1.msra.mxu0 %v16
  %55 = vmatprep.subr.mxu0 %v19
  %56 = vmatpush1.msra.mxu0 %v18
  %57 = vmatprep.subr.mxu0 %v21
  %58 = vmatpush1.msra.mxu0 %v20
  %59 = vmatprep.subr.mxu0 %v23
  %60 = vmatpush1.msra.mxu0 %v22
  %61 = vmatprep.subr.mxu0 %v25
  %62 = vmatpush1.msra.mxu0 %v24
  %63 = vmatprep.subr.mxu0 %v27
  %64 = vmatpush1.msra.mxu0 %v26
  %65 = vmatprep.subr.mxu0 %v29
  %66 = vmatpush1.msra.mxu0 %v28
  %67 = vmatprep.subr.mxu0 %v31
  %68 = vmatpush1.msra.mxu0 %v30
  %69 = vmatprep.subr.mxu0 0.0
  %70 = vmatpush1.msra.mxu0 0.0
  %71 = vmatprep.subr.mxu0 0.0
  %72 = vmatpush1.msra.mxu0 0.0
  %73 = vmatprep.subr.mxu0 0.0
  %74 = vmatpush1.msra.mxu0 0.0
  %75 = vmatprep.subr.mxu0 0.0
  %76 = vmatpush1.msra.mxu0 0.0
  %77 = vmatprep.subr.mxu0 0.0
  %78 = vmatpush1.msra.mxu0 0.0
  %79 = vmatprep.subr.mxu0 0.0
  %80 = vmatpush1.msra.mxu0 0.0
  %81 = vmatprep.subr.mxu0 0.0
  %82 = vmatpush1.msra.mxu0 0.0
  %83 = vmatprep.subr.mxu0 0.0
  %84 = vmatpush1.msra.mxu0 0.0
  %85 = vmatprep.subr.mxu0 0.0
  %86 = vmatpush1.msra.mxu0 0.0
  %87 = vmatprep.subr.mxu0 0.0
  %88 = vmatpush1.msra.mxu0 0.0
  %89 = vmatprep.subr.mxu0 0.0
  %90 = vmatpush1.msra.mxu0 0.0
  %91 = vmatprep.subr.mxu0 0.0
  %92 = vmatpush1.msra.mxu0 0.0
  %93 = vmatprep.subr.mxu0 0.0
  %94 = vmatpush1.msra.mxu0 0.0
  %95 = vmatprep.subr.mxu0 0.0
  %96 = vmatpush1.msra.mxu0 0.0
  %97 = vmatprep.subr.mxu0 0.0
  %98 = vmatpush1.msra.mxu0 0.0
  %99 = vmatprep.subr.mxu0 0.0
  %100 = vmatpush1.msra.mxu0 0.0
  %101 = vmatprep.subr.mxu0 0.0
  %102 = vmatpush1.msra.mxu0 0.0
  %103 = vmatprep.subr.mxu0 0.0
  %104 = vmatpush1.msra.mxu0 0.0
  %105 = vmatprep.subr.mxu0 0.0
  %106 = vmatpush1.msra.mxu0 0.0
  %107 = vmatprep.subr.mxu0 0.0
  %108 = vmatpush1.msra.mxu0 0.0
  %109 = vmatprep.subr.mxu0 0.0
  %110 = vmatpush1.msra.mxu0 0.0
  %111 = vmatprep.subr.mxu0 0.0
  %112 = vmatpush1.msra.mxu0 0.0
  %113 = vmatprep.subr.mxu0 0.0
  %114 = vmatpush1.msra.mxu0 0.0
  %115 = vmatprep.subr.mxu0 0.0
  %116 = vmatpush1.msra.mxu0 0.0
  %117 = vmatprep.mubr.f32.mxu0 0.0
  %118 = vmatmul.mubr.f32.gmra.mrb[0].mxu0 %v39
  %v119 = vpop.f32.mrb[0].mxu0
  %v120 = vadd.f32 0.0, %v119
  %v121 = vpop.f32.mrb[0].mxu0
  %v122 = vadd.f32 0.0, %v121
  %123 = vmatprep.mubr.f32.mxu0 0.0
  %124 = vmatmul.mubr.f32.gmra.mrb[0].mxu0 %v42
  %v125 = vpop.f32.mrb[0].mxu0
  %v126 = vadd.f32 0.0, %v125
  %v127 = vpop.f32.mrb[0].mxu0
  %v128 = vadd.f32 0.0, %v127
  %129 = vmatprep.mubr.f32.mxu0 0.0
  %130 = vmatmul.mubr.f32.gmra.mrb[0].mxu0 %v45
  %v131 = vpop.f32.mrb[0].mxu0
  %v132 = vadd.f32 0.0, %v131
  %v133 = vpop.f32.mrb[0].mxu0
  %v134 = vadd.f32 0.0, %v133
  %135 = vmatprep.mubr.f32.mxu0 0.0
  %136 = vmatmul.mubr.f32.gmra.mrb[0].mxu0 %v48
  %v137 = vpop.f32.mrb[0].mxu0
  %v138 = vadd.f32 0.0, %v137
  %v139 = vpop.f32.mrb[0].mxu0
  %v140 = vadd.f32 0.0, %v139
  %141 = vmatprep.mubr.f32.mxu0 0.0
  %142 = vmatmul.mubr.f32.gmra.mrb[0].mxu0 %v51
  %v143 = vpop.f32.mrb[0].mxu0
  %v144 = vadd.f32 0.0, %v143
  %v145 = vpop.f32.mrb[0].mxu0
  %v146 = vadd.f32 0.0, %v145
  %147 = vdwg.mxu0
  %v148 = vld [vmem:[%s1] sm:$0xff]
  %v149 = vld [vmem:[%s1 + $0x8] sm:$0xff]
  %v150 = vld [vmem:[%s1 + $0x10] sm:$0xff]
  %v151 = vld [vmem:[%s1 + $0x18] sm:$0xff]
  %v152 = vld [vmem:[%s1 + $0x20] sm:$0xff]
  %v154 = vsel %vm37, %v148, 0
  %v157 = vsel %vm37, %v149, 0
  %v160 = vsel %vm37, %v150, 0
  %v163 = vsel %vm37, %v151, 0
  %v166 = vsel %vm37, %v152, 0
  %168 = vmatprep.subr.mxu0 %v17
  %169 = vmatpush1.msra.mxu0 %v16
  %170 = vmatprep.subr.mxu0 %v19
  %171 = vmatpush1.msra.mxu0 %v18
  %172 = vmatprep.subr.mxu0 %v21
  %173 = vmatpush1.msra.mxu0 %v20
  %174 = vmatprep.subr.mxu0 %v23
  %175 = vmatpush1.msra.mxu0 %v22
  %176 = vmatprep.subr.mxu0 %v25
  %177 = vmatpush1.msra.mxu0 %v24
  %178 = vmatprep.subr.mxu0 %v27
  %179 = vmatpush1.msra.mxu0 %v26
  %180 = vmatprep.subr.mxu0 %v29
  %181 = vmatpush1.msra.mxu0 %v28
  %182 = vmatprep.subr.mxu0 %v31
  %183 = vmatpush1.msra.mxu0 %v30
  %184 = vmatprep.subr.mxu0 0.0
  %185 = vmatpush1.msra.mxu0 0.0
  %186 = vmatprep.subr.mxu0 0.0
  %187 = vmatpush1.msra.mxu0 0.0
  %188 = vmatprep.subr.mxu0 0.0
  %189 = vmatpush1.msra.mxu0 0.0
  %190 = vmatprep.subr.mxu0 0.0
  %191 = vmatpush1.msra.mxu0 0.0
  %192 = vmatprep.subr.mxu0 0.0
  %193 = vmatpush1.msra.mxu0 0.0
  %194 = vmatprep.subr.mxu0 0.0
  %195 = vmatpush1.msra.mxu0 0.0
  %196 = vmatprep.subr.mxu0 0.0
  %197 = vmatpush1.msra.mxu0 0.0
  %198 = vmatprep.subr.mxu0 0.0
  %199 = vmatpush1.msra.mxu0 0.0
  %200 = vmatprep.subr.mxu0 0.0
  %201 = vmatpush1.msra.mxu0 0.0
  %202 = vmatprep.subr.mxu0 0.0
  %203 = vmatpush1.msra.mxu0 0.0
  %204 = vmatprep.subr.mxu0 0.0
  %205 = vmatpush1.msra.mxu0 0.0
  %206 = vmatprep.subr.mxu0 0.0
  %207 = vmatpush1.msra.mxu0 0.0
  %208 = vmatprep.subr.mxu0 0.0
  %209 = vmatpush1.msra.mxu0 0.0
  %210 = vmatprep.subr.mxu0 0.0
  %211 = vmatpush1.msra.mxu0 0.0
  %212 = vmatprep.subr.mxu0 0.0
  %213 = vmatpush1.msra.mxu0 0.0
  %214 = vmatprep.subr.mxu0 0.0
  %215 = vmatpush1.msra.mxu0 0.0
  %216 = vmatprep.subr.mxu0 0.0
  %217 = vmatpush1.msra.mxu0 0.0
  %218 = vmatprep.subr.mxu0 0.0
  %219 = vmatpush1.msra.mxu0 0.0
  %220 = vmatprep.subr.mxu0 0.0
  %221 = vmatpush1.msra.mxu0 0.0
  %222 = vmatprep.subr.mxu0 0.0
  %223 = vmatpush1.msra.mxu0 0.0
  %224 = vmatprep.subr.mxu0 0.0
  %225 = vmatpush1.msra.mxu0 0.0
  %226 = vmatprep.subr.mxu0 0.0
  %227 = vmatpush1.msra.mxu0 0.0
  %228 = vmatprep.subr.mxu0 0.0
  %229 = vmatpush1.msra.mxu0 0.0
  %230 = vmatprep.subr.mxu0 0.0
  %231 = vmatpush1.msra.mxu0 0.0
  %232 = vmatprep.mubr.f32.mxu0 0.0
  %233 = vmatmul.mubr.f32.gmra.mrb[0].mxu0 %v154
  %v234 = vpop.f32.mrb[0].mxu0
  %v235 = vadd.f32 0.0, %v234
  %v236 = vpop.f32.mrb[0].mxu0
  %v237 = vadd.f32 0.0, %v236
  %238 = vmatprep.mubr.f32.mxu0 0.0
  %239 = vmatmul.mubr.f32.gmra.mrb[0].mxu0 %v157
  %v240 = vpop.f32.mrb[0].mxu0
  %v241 = vadd.f32 0.0, %v240
  %v242 = vpop.f32.mrb[0].mxu0
  %v243 = vadd.f32 0.0, %v242
  %244 = vmatprep.mubr.f32.mxu0 0.0
  %245 = vmatmul.mubr.f32.gmra.mrb[0].mxu0 %v160
  %v246 = vpop.f32.mrb[0].mxu0
  %v247 = vadd.f32 0.0, %v246
  %v248 = vpop.f32.mrb[0].mxu0
  %v249 = vadd.f32 0.0, %v248
  %250 = vmatprep.mubr.f32.mxu0 0.0
  %251 = vmatmul.mubr.f32.gmra.mrb[0].mxu0 %v163
  %v252 = vpop.f32.mrb[0].mxu0
  %v253 = vadd.f32 0.0, %v252
  %v254 = vpop.f32.mrb[0].mxu0
  %v255 = vadd.f32 0.0, %v254
  %256 = vmatprep.mubr.f32.mxu0 0.0
  %257 = vmatmul.mubr.f32.gmra.mrb[0].mxu0 %v166
  %v258 = vpop.f32.mrb[0].mxu0
  %v259 = vadd.f32 0.0, %v258
  %v260 = vpop.f32.mrb[0].mxu0
  %v261 = vadd.f32 0.0, %v260
  %262 = vdwg.mxu0
  %v263 = vmul.f32 %v120, %v120
  %v264 = vmul.f32 %v126, %v126
  %v265 = vmul.f32 %v132, %v132
  %v266 = vmul.f32 %v138, %v138
  %v267 = vmul.f32 %v144, %v144
  %v268 = vmul.f32 %v122, %v122
  %v269 = vmul.f32 %v128, %v128
  %v270 = vmul.f32 %v134, %v134
  %v271 = vmul.f32 %v140, %v140
  %v272 = vmul.f32 %v146, %v146
  %v273 = vadd.f32 %v263, %v268
  %v274 = vadd.f32 %v264, %v269
  %v275 = vadd.f32 %v265, %v270
  %v276 = vadd.f32 %v266, %v271
  %v277 = vadd.f32 %v267, %v272
  %v278 = vrsqrt.pop %v273
  %v279 = vmul.f32 %v273, %v278
  %vm280 = vcmp.eq.f32.partialorder %v273, inf
  %v281 = vsel %vm280, %v273, %v279
  %vm282 = vcmp.eq.f32.partialorder %v273, 0.0
  %v283 = vand.u32 %v273, 2147483648
  %v284 = vsel %vm282, %v283, %v281
  %v285 = vrsqrt.pop %v274
  %v286 = vmul.f32 %v274, %v285
  %vm287 = vcmp.eq.f32.partialorder %v274, inf
  %v288 = vsel %vm287, %v274, %v286
  %vm289 = vcmp.eq.f32.partialorder %v274, 0.0
  %v290 = vand.u32 %v274, 2147483648
  %v291 = vsel %vm289, %v290, %v288
  %v292 = vrsqrt.pop %v275
  %v293 = vmul.f32 %v275, %v292
  %vm294 = vcmp.eq.f32.partialorder %v275, inf
  %v295 = vsel %vm294, %v275, %v293
  %vm296 = vcmp.eq.f32.partialorder %v275, 0.0
  %v297 = vand.u32 %v275, 2147483648
  %v298 = vsel %vm296, %v297, %v295
  %v299 = vrsqrt.pop %v276
  %v300 = vmul.f32 %v276, %v299
  %vm301 = vcmp.eq.f32.partialorder %v276, inf
  %v302 = vsel %vm301, %v276, %v300
  %vm303 = vcmp.eq.f32.partialorder %v276, 0.0
  %v304 = vand.u32 %v276, 2147483648
  %v305 = vsel %vm303, %v304, %v302
  %v306 = vrsqrt.pop %v277
  %v307 = vmul.f32 %v277, %v306
  %vm308 = vcmp.eq.f32.partialorder %v277, inf
  %v309 = vsel %vm308, %v277, %v307
  %vm310 = vcmp.eq.f32.partialorder %v277, 0.0
  %v311 = vand.u32 %v277, 2147483648
  %v312 = vsel %vm310, %v311, %v309
  %v313 = vmul.f32 %v235, %v235
  %v314 = vmul.f32 %v241, %v241
  %v315 = vmul.f32 %v247, %v247
  %v316 = vmul.f32 %v253, %v253
  %v317 = vmul.f32 %v259, %v259
  %v318 = vmul.f32 %v237, %v237
  %v319 = vmul.f32 %v243, %v243
  %v320 = vmul.f32 %v249, %v249
  %v321 = vmul.f32 %v255, %v255
  %v322 = vmul.f32 %v261, %v261
  %v323 = vadd.f32 %v313, %v318
  %v324 = vadd.f32 %v314, %v319
  %v325 = vadd.f32 %v315, %v320
  %v326 = vadd.f32 %v316, %v321
  %v327 = vadd.f32 %v317, %v322
  %v328 = vrsqrt.pop %v323
  %v329 = vmul.f32 %v323, %v328
  %vm330 = vcmp.eq.f32.partialorder %v323, inf
  %v331 = vsel %vm330, %v323, %v329
  %vm332 = vcmp.eq.f32.partialorder %v323, 0.0
  %v333 = vand.u32 %v323, 2147483648
  %v334 = vsel %vm332, %v333, %v331
  %v335 = vrsqrt.pop %v324
  %v336 = vmul.f32 %v324, %v335
  %vm337 = vcmp.eq.f32.partialorder %v324, inf
  %v338 = vsel %vm337, %v324, %v336
  %vm339 = vcmp.eq.f32.partialorder %v324, 0.0
  %v340 = vand.u32 %v324, 2147483648
  %v341 = vsel %vm339, %v340, %v338
  %v342 = vrsqrt.pop %v325
  %v343 = vmul.f32 %v325, %v342
  %vm344 = vcmp.eq.f32.partialorder %v325, inf
  %v345 = vsel %vm344, %v325, %v343
  %vm346 = vcmp.eq.f32.partialorder %v325, 0.0
  %v347 = vand.u32 %v325, 2147483648
  %v348 = vsel %vm346, %v347, %v345
  %v349 = vrsqrt.pop %v326
  %v350 = vmul.f32 %v326, %v349
  %vm351 = vcmp.eq.f32.partialorder %v326, inf
  %v352 = vsel %vm351, %v326, %v350
  %vm353 = vcmp.eq.f32.partialorder %v326, 0.0
  %v354 = vand.u32 %v326, 2147483648
  %v355 = vsel %vm353, %v354, %v352
  %v356 = vrsqrt.pop %v327
  %v357 = vmul.f32 %v327, %v356
  %vm358 = vcmp.eq.f32.partialorder %v327, inf
  %v359 = vsel %vm358, %v327, %v357
  %vm360 = vcmp.eq.f32.partialorder %v327, 0.0
  %v361 = vand.u32 %v327, 2147483648
  %v362 = vsel %vm360, %v361, %v359
  %v363 = vsub.f32 %v284, %v334
  %v364 = vsub.f32 %v291, %v341
  %v365 = vsub.f32 %v298, %v348
  %v366 = vsub.f32 %v305, %v355
  %v367 = vsub.f32 %v312, %v362
  %v368 = vand.u32 2147483647, %v363
  %v369 = vand.u32 2147483647, %v364
  %v370 = vand.u32 2147483647, %v365
  %v371 = vand.u32 2147483647, %v366
  %v372 = vand.u32 2147483647, %v367
  %v373 = vadd.f32 %v284, 1e-07
  %v374 = vadd.f32 %v291, 1e-07
  %v375 = vadd.f32 %v298, 1e-07
  %v376 = vadd.f32 %v305, 1e-07
  %v377 = vadd.f32 %v312, 1e-07
  %v378 = vadd.f32 %v334, 1e-07
  %v379 = vadd.f32 %v341, 1e-07
  %v380 = vadd.f32 %v348, 1e-07
  %v381 = vadd.f32 %v355, 1e-07
  %v382 = vadd.f32 %v362, 1e-07
  %v383 = vrcp.pop %v378
  %v384 = vmul.f32 %v373, %v383
  %v385 = vrcp.pop %v379
  %v386 = vmul.f32 %v374, %v385
  %v387 = vrcp.pop %v380
  %v388 = vmul.f32 %v375, %v387
  %v389 = vrcp.pop %v381
  %v390 = vmul.f32 %v376, %v389
  %v391 = vrcp.pop %v382
  %v392 = vmul.f32 %v377, %v391
  %v393 = vlog2.pop %v384
  %v394 = vmul.f32 %v393, 0.6931472
  %v395 = vlog2.pop %v386
  %v396 = vmul.f32 %v395, 0.6931472
  %v397 = vlog2.pop %v388
  %v398 = vmul.f32 %v397, 0.6931472
  %v399 = vlog2.pop %v390
  %v400 = vmul.f32 %v399, 0.6931472
  %v401 = vlog2.pop %v392
  %v402 = vmul.f32 %v401, 0.6931472
  %v403 = vand.u32 2147483647, %v394
  %v404 = vand.u32 2147483647, %v396
  %v405 = vand.u32 2147483647, %v398
  %v406 = vand.u32 2147483647, %v400
  %v407 = vand.u32 2147483647, %v402
  %v408 = vadd.f32 %v368, %v369
  %v409 = vadd.f32 %v408, %v370
  %v410 = vadd.f32 %v409, %v371
  %v411 = vadd.f32 %v410, %v372
  %412 = vst [vmem:[%s3] sm:$0xff] %v411
  %v413 = vadd.f32 %v403, %v404
  %v414 = vadd.f32 %v413, %v405
  %v415 = vadd.f32 %v414, %v406
  %v416 = vadd.f32 %v415, %v407
  %417 = vst [vmem:[%s4] sm:$0xff] %v416
  // Predicated region
  $region14: #{_forward.3} parent=0 // pred_check
    _
  $region15: #{_forward.3} parent=0 // pred_check_branch
    %419 = sbr.rel (0) target = $region17
  $region16: #{_forward.3} parent=0 // pred_region
    _
  $region17: #{_forward.3} parent=0 // pred_fallthru
    _
  // Predicated region
  $region18: #{_forward.3} parent=0 // pred_check
    _
  $region19: #{_forward.3} parent=0 // pred_check_branch
    %421 = sbr.rel (0) target = $region21
  $region20: #{_forward.3} parent=0 // pred_region
    _
  $region21: #{_forward.3} parent=0 // pred_fallthru
    _
  // Predicated region
  $region22: #{_forward.3} parent=0 // pred_check
    _
  $region23: #{_forward.3} parent=0 // pred_check_branch
    %423 = sbr.rel (0) target = $region25
  $region24: #{_forward.3} parent=0 // pred_region
    _
  $region25: #{_forward.3} parent=0 // pred_fallthru
    _
  // Predicated region
  $region26: #{_forward.3} parent=0 // pred_check
    _
  $region27: #{_forward.3} parent=0 // pred_check_branch
    %425 = sbr.rel (0) target = $region29
  $region28: #{_forward.3} parent=0 // pred_region
    _
  $region29: #{_forward.3} parent=0 // pred_fallthru
    _

// kernel: _forward.4
$region0: #{_forward.4}
  #allocation0 [shape = 'u32[]', space=smem, size = 0x4, offset = 0x4, fixed_abs, tag = 'smem constant byte address 0x4 - core index']
  #allocation1 [shape = 'u32[144,128]{1,0:T(1,128)}', space=vmem, size = 0x12000, scoped, tag = 'internal scratch']
  %s0 = inlined_call_operand.vmem [shape: f32[72,32], index: 0, kind: input, shape index: {}]
  %s1 = inlined_call_operand.vmem [shape: f32[72,32], index: 1, kind: input, shape index: {}]
  %s2 = inlined_call_operand.vmem [shape: f32[32,256], index: 2, kind: input, shape index: {}]
  %s3 = inlined_call_operand.vmem [shape: f32[1,8,128], index: 3, kind: output, shape index: {0}]
  %s4 = inlined_call_operand.vmem [shape: f32[1,8,128], index: 4, kind: output, shape index: {1}]
  %5 = xla_tuple %s3, %s4
  %s6 = sld [smem:[#allocation0]]
  $region30: #{_forward.4} parent=0
    _
  %s8 = ssub.s32 1, %s6
  %s9 = scalar_select 0, %s8, %s6
  // Predicated region
  $region2: #{_forward.4} parent=0 // pred_check
    _
  $region3: #{_forward.4} parent=0 // pred_check_branch
    %11 = sbr.rel (0) target = $region5
  $region4: #{_forward.4} parent=0 // pred_region
    _
  $region5: #{_forward.4} parent=0 // pred_fallthru
    _
  // Predicated region
  $region6: #{_forward.4} parent=0 // pred_check
    _
  $region7: #{_forward.4} parent=0 // pred_check_branch
    %13 = sbr.rel (0) target = $region9
  $region8: #{_forward.4} parent=0 // pred_region
    _
  $region9: #{_forward.4} parent=0 // pred_fallthru
    _
  // Predicated region
  $region10: #{_forward.4} parent=0 // pred_check
    _
  $region11: #{_forward.4} parent=0 // pred_check_branch
    %15 = sbr.rel (0) target = $region13
  $region12: #{_forward.4} parent=0 // pred_region
    _
  $region13: #{_forward.4} parent=0 // pred_fallthru
    _
  %v16 = vld [vmem:[%s2] sm:$0xff]
  %v17 = vld [vmem:[%s2 + $0x8] sm:$0xff]
  %v18 = vld [vmem:[%s2 + $0x10] sm:$0xff]
  %v19 = vld [vmem:[%s2 + $0x18] sm:$0xff]
  %v20 = vld [vmem:[%s2 + $0x20] sm:$0xff]
  %v21 = vld [vmem:[%s2 + $0x28] sm:$0xff]
  %v22 = vld [vmem:[%s2 + $0x30] sm:$0xff]
  %v23 = vld [vmem:[%s2 + $0x38] sm:$0xff]
  %v24 = vld [vmem:[%s0] sm:$0xff]
  %v25 = vld [vmem:[%s0 + $0x8] sm:$0xff]
  %v26 = vld [vmem:[%s0 + $0x10] sm:$0xff]
  %v27 = vld [vmem:[%s0 + $0x18] sm:$0xff]
  %v28 = vld [vmem:[%s0 + $0x20] sm:$0xff]
  %v29 = vld [vmem:[%s0 + $0x28] sm:$0xff]
  %v30 = vld [vmem:[%s0 + $0x30] sm:$0xff]
  %v31 = vld [vmem:[%s0 + $0x38] sm:$0xff]
  %v32 = vld [vmem:[%s0 + $0x40] sm:$0xff]
  %vm33 = vcmask 261120
  %v35 = vsel %vm33, %v24, 0
  %v38 = vsel %vm33, %v25, 0
  %v41 = vsel %vm33, %v26, 0
  %v44 = vsel %vm33, %v27, 0
  %v47 = vsel %vm33, %v28, 0
  %v50 = vsel %vm33, %v29, 0
  %v53 = vsel %vm33, %v30, 0
  %v56 = vsel %vm33, %v31, 0
  %v59 = vsel %vm33, %v32, 0
  %61 = vmatprep.subr.mxu0 %v17
  %62 = vmatpush1.msra.mxu0 %v16
  %63 = vmatprep.subr.mxu0 %v19
  %64 = vmatpush1.msra.mxu0 %v18
  %65 = vmatprep.subr.mxu0 %v21
  %66 = vmatpush1.msra.mxu0 %v20
  %67 = vmatprep.subr.mxu0 %v23
  %68 = vmatpush1.msra.mxu0 %v22
  %69 = vmatprep.subr.mxu0 0.0
  %70 = vmatpush1.msra.mxu0 0.0
  %71 = vmatprep.subr.mxu0 0.0
  %72 = vmatpush1.msra.mxu0 0.0
  %73 = vmatprep.subr.mxu0 0.0
  %74 = vmatpush1.msra.mxu0 0.0
  %75 = vmatprep.subr.mxu0 0.0
  %76 = vmatpush1.msra.mxu0 0.0
  %77 = vmatprep.subr.mxu0 0.0
  %78 = vmatpush1.msra.mxu0 0.0
  %79 = vmatprep.subr.mxu0 0.0
  %80 = vmatpush1.msra.mxu0 0.0
  %81 = vmatprep.subr.mxu0 0.0
  %82 = vmatpush1.msra.mxu0 0.0
  %83 = vmatprep.subr.mxu0 0.0
  %84 = vmatpush1.msra.mxu0 0.0
  %85 = vmatprep.subr.mxu0 0.0
  %86 = vmatpush1.msra.mxu0 0.0
  %87 = vmatprep.subr.mxu0 0.0
  %88 = vmatpush1.msra.mxu0 0.0
  %89 = vmatprep.subr.mxu0 0.0
  %90 = vmatpush1.msra.mxu0 0.0
  %91 = vmatprep.subr.mxu0 0.0
  %92 = vmatpush1.msra.mxu0 0.0
  %93 = vmatprep.subr.mxu0 0.0
  %94 = vmatpush1.msra.mxu0 0.0
  %95 = vmatprep.subr.mxu0 0.0
  %96 = vmatpush1.msra.mxu0 0.0
  %97 = vmatprep.subr.mxu0 0.0
  %98 = vmatpush1.msra.mxu0 0.0
  %99 = vmatprep.subr.mxu0 0.0
  %100 = vmatpush1.msra.mxu0 0.0
  %101 = vmatprep.subr.mxu0 0.0
  %102 = vmatpush1.msra.mxu0 0.0
  %103 = vmatprep.subr.mxu0 0.0
  %104 = vmatpush1.msra.mxu0 0.0
  %105 = vmatprep.subr.mxu0 0.0
  %106 = vmatpush1.msra.mxu0 0.0
  %107 = vmatprep.subr.mxu0 0.0
  %108 = vmatpush1.msra.mxu0 0.0
  %109 = vmatprep.subr.mxu0 0.0
  %110 = vmatpush1.msra.mxu0 0.0
  %111 = vmatprep.subr.mxu0 0.0
  %112 = vmatpush1.msra.mxu0 0.0
  %113 = vmatprep.subr.mxu0 0.0
  %114 = vmatpush1.msra.mxu0 0.0
  %115 = vmatprep.subr.mxu0 0.0
  %116 = vmatpush1.msra.mxu0 0.0
  %117 = vmatprep.subr.mxu0 0.0
  %118 = vmatpush1.msra.mxu0 0.0
  %119 = vmatprep.subr.mxu0 0.0
  %120 = vmatpush1.msra.mxu0 0.0
  %121 = vmatprep.subr.mxu0 0.0
  %122 = vmatpush1.msra.mxu0 0.0
  %123 = vmatprep.subr.mxu0 0.0
  %124 = vmatpush1.msra.mxu0 0.0
  %125 = vmatprep.mubr.f32.mxu0 0.0
  %126 = vmatmul.mubr.f32.gmra.mrb[0].mxu0 %v35
  %v127 = vpop.f32.mrb[0].mxu0
  %v128 = vadd.f32 0.0, %v127
  %v129 = vpop.f32.mrb[0].mxu0
  %v130 = vadd.f32 0.0, %v129
  %131 = vmatprep.mubr.f32.mxu0 0.0
  %132 = vmatmul.mubr.f32.gmra.mrb[0].mxu0 %v38
  %v133 = vpop.f32.mrb[0].mxu0
  %v134 = vadd.f32 0.0, %v133
  %v135 = vpop.f32.mrb[0].mxu0
  %v136 = vadd.f32 0.0, %v135
  %137 = vmatprep.mubr.f32.mxu0 0.0
  %138 = vmatmul.mubr.f32.gmra.mrb[0].mxu0 %v41
  %v139 = vpop.f32.mrb[0].mxu0
  %v140 = vadd.f32 0.0, %v139
  %v141 = vpop.f32.mrb[0].mxu0
  %v142 = vadd.f32 0.0, %v141
  %143 = vmatprep.mubr.f32.mxu0 0.0
  %144 = vmatmul.mubr.f32.gmra.mrb[0].mxu0 %v44
  %v145 = vpop.f32.mrb[0].mxu0
  %v146 = vadd.f32 0.0, %v145
  %v147 = vpop.f32.mrb[0].mxu0
  %v148 = vadd.f32 0.0, %v147
  %149 = vmatprep.mubr.f32.mxu0 0.0
  %150 = vmatmul.mubr.f32.gmra.mrb[0].mxu0 %v47
  %v151 = vpop.f32.mrb[0].mxu0
  %v152 = vadd.f32 0.0, %v151
  %v153 = vpop.f32.mrb[0].mxu0
  %v154 = vadd.f32 0.0, %v153
  %155 = vmatprep.mubr.f32.mxu0 0.0
  %156 = vmatmul.mubr.f32.gmra.mrb[0].mxu0 %v50
  %v157 = vpop.f32.mrb[0].mxu0
  %v158 = vadd.f32 0.0, %v157
  %v159 = vpop.f32.mrb[0].mxu0
  %v160 = vadd.f32 0.0, %v159
  %161 = vmatprep.mubr.f32.mxu0 0.0
  %162 = vmatmul.mubr.f32.gmra.mrb[0].mxu0 %v53
  %v163 = vpop.f32.mrb[0].mxu0
  %v164 = vadd.f32 0.0, %v163
  %v165 = vpop.f32.mrb[0].mxu0
  %v166 = vadd.f32 0.0, %v165
  %167 = vmatprep.mubr.f32.mxu0 0.0
  %168 = vmatmul.mubr.f32.gmra.mrb[0].mxu0 %v56
  %v169 = vpop.f32.mrb[0].mxu0
  %v170 = vadd.f32 0.0, %v169
  %v171 = vpop.f32.mrb[0].mxu0
  %v172 = vadd.f32 0.0, %v171
  %173 = vmatprep.mubr.f32.mxu0 0.0
  %174 = vmatmul.mubr.f32.gmra.mrb[0].mxu0 %v59
  %v175 = vpop.f32.mrb[0].mxu0
  %v176 = vadd.f32 0.0, %v175
  %v177 = vpop.f32.mrb[0].mxu0
  %v178 = vadd.f32 0.0, %v177
  %179 = vdwg.mxu0
  %v180 = vld [vmem:[%s1] sm:$0xff]
  %v181 = vld [vmem:[%s1 + $0x8] sm:$0xff]
  %v182 = vld [vmem:[%s1 + $0x10] sm:$0xff]
  %v183 = vld [vmem:[%s1 + $0x18] sm:$0xff]
  %v184 = vld [vmem:[%s1 + $0x20] sm:$0xff]
  %v185 = vld [vmem:[%s1 + $0x28] sm:$0xff]
  %v186 = vld [vmem:[%s1 + $0x30] sm:$0xff]
  %v187 = vld [vmem:[%s1 + $0x38] sm:$0xff]
  %v188 = vld [vmem:[%s1 + $0x40] sm:$0xff]
  %v190 = vsel %vm33, %v180, 0
  %v193 = vsel %vm33, %v181, 0
  %v196 = vsel %vm33, %v182, 0
  %v199 = vsel %vm33, %v183, 0
  %v202 = vsel %vm33, %v184, 0
  %v205 = vsel %vm33, %v185, 0
  %v208 = vsel %vm33, %v186, 0
  %v211 = vsel %vm33, %v187, 0
  %v214 = vsel %vm33, %v188, 0
  %216 = vmatprep.subr.mxu0 %v17
  %217 = vmatpush1.msra.mxu0 %v16
  %218 = vmatprep.subr.mxu0 %v19
  %219 = vmatpush1.msra.mxu0 %v18
  %220 = vmatprep.subr.mxu0 %v21
  %221 = vmatpush1.msra.mxu0 %v20
  %222 = vmatprep.subr.mxu0 %v23
  %223 = vmatpush1.msra.mxu0 %v22
  %224 = vmatprep.subr.mxu0 0.0
  %225 = vmatpush1.msra.mxu0 0.0
  %226 = vmatprep.subr.mxu0 0.0
  %227 = vmatpush1.msra.mxu0 0.0
  %228 = vmatprep.subr.mxu0 0.0
  %229 = vmatpush1.msra.mxu0 0.0
  %230 = vmatprep.subr.mxu0 0.0
  %231 = vmatpush1.msra.mxu0 0.0
  %232 = vmatprep.subr.mxu0 0.0
  %233 = vmatpush1.msra.mxu0 0.0
  %234 = vmatprep.subr.mxu0 0.0
  %235 = vmatpush1.msra.mxu0 0.0
  %236 = vmatprep.subr.mxu0 0.0
  %237 = vmatpush1.msra.mxu0 0.0
  %238 = vmatprep.subr.mxu0 0.0
  %239 = vmatpush1.msra.mxu0 0.0
  %240 = vmatprep.subr.mxu0 0.0
  %241 = vmatpush1.msra.mxu0 0.0
  %242 = vmatprep.subr.mxu0 0.0
  %243 = vmatpush1.msra.mxu0 0.0
  %244 = vmatprep.subr.mxu0 0.0
  %245 = vmatpush1.msra.mxu0 0.0
  %246 = vmatprep.subr.mxu0 0.0
  %247 = vmatpush1.msra.mxu0 0.0
  %248 = vmatprep.subr.mxu0 0.0
  %249 = vmatpush1.msra.mxu0 0.0
  %250 = vmatprep.subr.mxu0 0.0
  %251 = vmatpush1.msra.mxu0 0.0
  %252 = vmatprep.subr.mxu0 0.0
  %253 = vmatpush1.msra.mxu0 0.0
  %254 = vmatprep.subr.mxu0 0.0
  %255 = vmatpush1.msra.mxu0 0.0
  %256 = vmatprep.subr.mxu0 0.0
  %257 = vmatpush1.msra.mxu0 0.0
  %258 = vmatprep.subr.mxu0 0.0
  %259 = vmatpush1.msra.mxu0 0.0
  %260 = vmatprep.subr.mxu0 0.0
  %261 = vmatpush1.msra.mxu0 0.0
  %262 = vmatprep.subr.mxu0 0.0
  %263 = vmatpush1.msra.mxu0 0.0
  %264 = vmatprep.subr.mxu0 0.0
  %265 = vmatpush1.msra.mxu0 0.0
  %266 = vmatprep.subr.mxu0 0.0
  %267 = vmatpush1.msra.mxu0 0.0
  %268 = vmatprep.subr.mxu0 0.0
  %269 = vmatpush1.msra.mxu0 0.0
  %270 = vmatprep.subr.mxu0 0.0
  %271 = vmatpush1.msra.mxu0 0.0
  %272 = vmatprep.subr.mxu0 0.0
  %273 = vmatpush1.msra.mxu0 0.0
  %274 = vmatprep.subr.mxu0 0.0
  %275 = vmatpush1.msra.mxu0 0.0
  %276 = vmatprep.subr.mxu0 0.0
  %277 = vmatpush1.msra.mxu0 0.0
  %278 = vmatprep.subr.mxu0 0.0
  %279 = vmatpush1.msra.mxu0 0.0
  %280 = vmatprep.mubr.f32.mxu0 0.0
  %281 = vmatmul.mubr.f32.gmra.mrb[0].mxu0 %v190
  %v282 = vpop.f32.mrb[0].mxu0
  %v283 = vadd.f32 0.0, %v282
  %v284 = vpop.f32.mrb[0].mxu0
  %v285 = vadd.f32 0.0, %v284
  %286 = vmatprep.mubr.f32.mxu0 0.0
  %287 = vmatmul.mubr.f32.gmra.mrb[0].mxu0 %v193
  %v288 = vpop.f32.mrb[0].mxu0
  %v289 = vadd.f32 0.0, %v288
  %v290 = vpop.f32.mrb[0].mxu0
  %v291 = vadd.f32 0.0, %v290
  %292 = vmatprep.mubr.f32.mxu0 0.0
  %293 = vmatmul.mubr.f32.gmra.mrb[0].mxu0 %v196
  %v294 = vpop.f32.mrb[0].mxu0
  %v295 = vadd.f32 0.0, %v294
  %v296 = vpop.f32.mrb[0].mxu0
  %v297 = vadd.f32 0.0, %v296
  %298 = vmatprep.mubr.f32.mxu0 0.0
  %299 = vmatmul.mubr.f32.gmra.mrb[0].mxu0 %v199
  %v300 = vpop.f32.mrb[0].mxu0
  %v301 = vadd.f32 0.0, %v300
  %v302 = vpop.f32.mrb[0].mxu0
  %v303 = vadd.f32 0.0, %v302
  %304 = vmatprep.mubr.f32.mxu0 0.0
  %305 = vmatmul.mubr.f32.gmra.mrb[0].mxu0 %v202
  %v306 = vpop.f32.mrb[0].mxu0
  %v307 = vadd.f32 0.0, %v306
  %v308 = vpop.f32.mrb[0].mxu0
  %v309 = vadd.f32 0.0, %v308
  %310 = vmatprep.mubr.f32.mxu0 0.0
  %311 = vmatmul.mubr.f32.gmra.mrb[0].mxu0 %v205
  %v312 = vpop.f32.mrb[0].mxu0
  %v313 = vadd.f32 0.0, %v312
  %v314 = vpop.f32.mrb[0].mxu0
  %v315 = vadd.f32 0.0, %v314
  %316 = vmatprep.mubr.f32.mxu0 0.0
  %317 = vmatmul.mubr.f32.gmra.mrb[0].mxu0 %v208
  %v318 = vpop.f32.mrb[0].mxu0
  %v319 = vadd.f32 0.0, %v318
  %v320 = vpop.f32.mrb[0].mxu0
  %v321 = vadd.f32 0.0, %v320
  %322 = vmatprep.mubr.f32.mxu0 0.0
  %323 = vmatmul.mubr.f32.gmra.mrb[0].mxu0 %v211
  %v324 = vpop.f32.mrb[0].mxu0
  %v325 = vadd.f32 0.0, %v324
  %v326 = vpop.f32.mrb[0].mxu0
  %v327 = vadd.f32 0.0, %v326
  %328 = vmatprep.mubr.f32.mxu0 0.0
  %329 = vmatmul.mubr.f32.gmra.mrb[0].mxu0 %v214
  %v330 = vpop.f32.mrb[0].mxu0
  %v331 = vadd.f32 0.0, %v330
  %v332 = vpop.f32.mrb[0].mxu0
  %v333 = vadd.f32 0.0, %v332
  %334 = vdwg.mxu0
  %v335 = vmul.f32 %v128, %v128
  %v336 = vmul.f32 %v134, %v134
  %v337 = vmul.f32 %v140, %v140
  %v338 = vmul.f32 %v146, %v146
  %v339 = vmul.f32 %v152, %v152
  %v340 = vmul.f32 %v158, %v158
  %v341 = vmul.f32 %v164, %v164
  %v342 = vmul.f32 %v170, %v170
  %v343 = vmul.f32 %v176, %v176
  %v344 = vmul.f32 %v130, %v130
  %v345 = vmul.f32 %v136, %v136
  %v346 = vmul.f32 %v142, %v142
  %v347 = vmul.f32 %v148, %v148
  %v348 = vmul.f32 %v154, %v154
  %v349 = vmul.f32 %v160, %v160
  %v350 = vmul.f32 %v166, %v166
  %v351 = vmul.f32 %v172, %v172
  %v352 = vmul.f32 %v178, %v178
  %v353 = vadd.f32 %v335, %v344
  %v354 = vadd.f32 %v336, %v345
  %v355 = vadd.f32 %v337, %v346
  %v356 = vadd.f32 %v338, %v347
  %v357 = vadd.f32 %v339, %v348
  %v358 = vadd.f32 %v340, %v349
  %v359 = vadd.f32 %v341, %v350
  %v360 = vadd.f32 %v342, %v351
  %v361 = vadd.f32 %v343, %v352
  %v362 = vrsqrt.pop %v353
  %v363 = vmul.f32 %v353, %v362
  %vm364 = vcmp.eq.f32.partialorder %v353, inf
  %v365 = vsel %vm364, %v353, %v363
  %vm366 = vcmp.eq.f32.partialorder %v353, 0.0
  %v367 = vand.u32 %v353, 2147483648
  %v368 = vsel %vm366, %v367, %v365
  %v369 = vrsqrt.pop %v354
  %v370 = vmul.f32 %v354, %v369
  %vm371 = vcmp.eq.f32.partialorder %v354, inf
  %v372 = vsel %vm371, %v354, %v370
  %vm373 = vcmp.eq.f32.partialorder %v354, 0.0
  %v374 = vand.u32 %v354, 2147483648
  %v375 = vsel %vm373, %v374, %v372
  %v376 = vrsqrt.pop %v355
  %v377 = vmul.f32 %v355, %v376
  %vm378 = vcmp.eq.f32.partialorder %v355, inf
  %v379 = vsel %vm378, %v355, %v377
  %vm380 = vcmp.eq.f32.partialorder %v355, 0.0
  %v381 = vand.u32 %v355, 2147483648
  %v382 = vsel %vm380, %v381, %v379
  %v383 = vrsqrt.pop %v356
  %v384 = vmul.f32 %v356, %v383
  %vm385 = vcmp.eq.f32.partialorder %v356, inf
  %v386 = vsel %vm385, %v356, %v384
  %vm387 = vcmp.eq.f32.partialorder %v356, 0.0
  %v388 = vand.u32 %v356, 2147483648
  %v389 = vsel %vm387, %v388, %v386
  %v390 = vrsqrt.pop %v357
  %v391 = vmul.f32 %v357, %v390
  %vm392 = vcmp.eq.f32.partialorder %v357, inf
  %v393 = vsel %vm392, %v357, %v391
  %vm394 = vcmp.eq.f32.partialorder %v357, 0.0
  %v395 = vand.u32 %v357, 2147483648
  %v396 = vsel %vm394, %v395, %v393
  %v397 = vrsqrt.pop %v358
  %v398 = vmul.f32 %v358, %v397
  %vm399 = vcmp.eq.f32.partialorder %v358, inf
  %v400 = vsel %vm399, %v358, %v398
  %vm401 = vcmp.eq.f32.partialorder %v358, 0.0
  %v402 = vand.u32 %v358, 2147483648
  %v403 = vsel %vm401, %v402, %v400
  %v404 = vrsqrt.pop %v359
  %v405 = vmul.f32 %v359, %v404
  %vm406 = vcmp.eq.f32.partialorder %v359, inf
  %v407 = vsel %vm406, %v359, %v405
  %vm408 = vcmp.eq.f32.partialorder %v359, 0.0
  %v409 = vand.u32 %v359, 2147483648
  %v410 = vsel %vm408, %v409, %v407
  %v411 = vrsqrt.pop %v360
  %v412 = vmul.f32 %v360, %v411
  %vm413 = vcmp.eq.f32.partialorder %v360, inf
  %v414 = vsel %vm413, %v360, %v412
  %vm415 = vcmp.eq.f32.partialorder %v360, 0.0
  %v416 = vand.u32 %v360, 2147483648
  %v417 = vsel %vm415, %v416, %v414
  %v418 = vrsqrt.pop %v361
  %v419 = vmul.f32 %v361, %v418
  %vm420 = vcmp.eq.f32.partialorder %v361, inf
  %v421 = vsel %vm420, %v361, %v419
  %vm422 = vcmp.eq.f32.partialorder %v361, 0.0
  %v423 = vand.u32 %v361, 2147483648
  %v424 = vsel %vm422, %v423, %v421
  %v425 = vmul.f32 %v283, %v283
  %v426 = vmul.f32 %v289, %v289
  %v427 = vmul.f32 %v295, %v295
  %v428 = vmul.f32 %v301, %v301
  %v429 = vmul.f32 %v307, %v307
  %v430 = vmul.f32 %v313, %v313
  %v431 = vmul.f32 %v319, %v319
  %v432 = vmul.f32 %v325, %v325
  %v433 = vmul.f32 %v331, %v331
  %v434 = vmul.f32 %v285, %v285
  %v435 = vmul.f32 %v291, %v291
  %v436 = vmul.f32 %v297, %v297
  %v437 = vmul.f32 %v303, %v303
  %v438 = vmul.f32 %v309, %v309
  %v439 = vmul.f32 %v315, %v315
  %v440 = vmul.f32 %v321, %v321
  %v441 = vmul.f32 %v327, %v327
  %v442 = vmul.f32 %v333, %v333
  %v443 = vadd.f32 %v425, %v434
  %v444 = vadd.f32 %v426, %v435
  %v445 = vadd.f32 %v427, %v436
  %v446 = vadd.f32 %v428, %v437
  %v447 = vadd.f32 %v429, %v438
  %v448 = vadd.f32 %v430, %v439
  %v449 = vadd.f32 %v431, %v440
  %v450 = vadd.f32 %v432, %v441
  %v451 = vadd.f32 %v433, %v442
  %v452 = vrsqrt.pop %v443
  %v453 = vmul.f32 %v443, %v452
  %vm454 = vcmp.eq.f32.partialorder %v443, inf
  %v455 = vsel %vm454, %v443, %v453
  %vm456 = vcmp.eq.f32.partialorder %v443, 0.0
  %v457 = vand.u32 %v443, 2147483648
  %v458 = vsel %vm456, %v457, %v455
  %v459 = vrsqrt.pop %v444
  %v460 = vmul.f32 %v444, %v459
  %vm461 = vcmp.eq.f32.partialorder %v444, inf
  %v462 = vsel %vm461, %v444, %v460
  %vm463 = vcmp.eq.f32.partialorder %v444, 0.0
  %v464 = vand.u32 %v444, 2147483648
  %v465 = vsel %vm463, %v464, %v462
  %v466 = vrsqrt.pop %v445
  %v467 = vmul.f32 %v445, %v466
  %vm468 = vcmp.eq.f32.partialorder %v445, inf
  %v469 = vsel %vm468, %v445, %v467
  %vm470 = vcmp.eq.f32.partialorder %v445, 0.0
  %v471 = vand.u32 %v445, 2147483648
  %v472 = vsel %vm470, %v471, %v469
  %v473 = vrsqrt.pop %v446
  %v474 = vmul.f32 %v446, %v473
  %vm475 = vcmp.eq.f32.partialorder %v446, inf
  %v476 = vsel %vm475, %v446, %v474
  %vm477 = vcmp.eq.f32.partialorder %v446, 0.0
  %v478 = vand.u32 %v446, 2147483648
  %v479 = vsel %vm477, %v478, %v476
  %v480 = vrsqrt.pop %v447
  %v481 = vmul.f32 %v447, %v480
  %vm482 = vcmp.eq.f32.partialorder %v447, inf
  %v483 = vsel %vm482, %v447, %v481
  %vm484 = vcmp.eq.f32.partialorder %v447, 0.0
  %v485 = vand.u32 %v447, 2147483648
  %v486 = vsel %vm484, %v485, %v483
  %v487 = vrsqrt.pop %v448
  %v488 = vmul.f32 %v448, %v487
  %vm489 = vcmp.eq.f32.partialorder %v448, inf
  %v490 = vsel %vm489, %v448, %v488
  %vm491 = vcmp.eq.f32.partialorder %v448, 0.0
  %v492 = vand.u32 %v448, 2147483648
  %v493 = vsel %vm491, %v492, %v490
  %v494 = vrsqrt.pop %v449
  %v495 = vmul.f32 %v449, %v494
  %vm496 = vcmp.eq.f32.partialorder %v449, inf
  %v497 = vsel %vm496, %v449, %v495
  %vm498 = vcmp.eq.f32.partialorder %v449, 0.0
  %v499 = vand.u32 %v449, 2147483648
  %v500 = vsel %vm498, %v499, %v497
  %v501 = vrsqrt.pop %v450
  %v502 = vmul.f32 %v450, %v501
  %vm503 = vcmp.eq.f32.partialorder %v450, inf
  %v504 = vsel %vm503, %v450, %v502
  %vm505 = vcmp.eq.f32.partialorder %v450, 0.0
  %v506 = vand.u32 %v450, 2147483648
  %v507 = vsel %vm505, %v506, %v504
  %v508 = vrsqrt.pop %v451
  %v509 = vmul.f32 %v451, %v508
  %vm510 = vcmp.eq.f32.partialorder %v451, inf
  %v511 = vsel %vm510, %v451, %v509
  %vm512 = vcmp.eq.f32.partialorder %v451, 0.0
  %v513 = vand.u32 %v451, 2147483648
  %v514 = vsel %vm512, %v513, %v511
  %v515 = vsub.f32 %v368, %v458
  %v516 = vsub.f32 %v375, %v465
  %v517 = vsub.f32 %v382, %v472
  %v518 = vsub.f32 %v389, %v479
  %v519 = vsub.f32 %v396, %v486
  %v520 = vsub.f32 %v403, %v493
  %v521 = vsub.f32 %v410, %v500
  %v522 = vsub.f32 %v417, %v507
  %v523 = vsub.f32 %v424, %v514
  %v524 = vand.u32 2147483647, %v515
  %v525 = vand.u32 2147483647, %v516
  %v526 = vand.u32 2147483647, %v517
  %v527 = vand.u32 2147483647, %v518
  %v528 = vand.u32 2147483647, %v519
  %v529 = vand.u32 2147483647, %v520
  %v530 = vand.u32 2147483647, %v521
  %v531 = vand.u32 2147483647, %v522
  %v532 = vand.u32 2147483647, %v523
  %v533 = vadd.f32 %v368, 1e-07
  %v534 = vadd.f32 %v375, 1e-07
  %v535 = vadd.f32 %v382, 1e-07
  %v536 = vadd.f32 %v389, 1e-07
  %v537 = vadd.f32 %v396, 1e-07
  %v538 = vadd.f32 %v403, 1e-07
  %v539 = vadd.f32 %v410, 1e-07
  %v540 = vadd.f32 %v417, 1e-07
  %v541 = vadd.f32 %v424, 1e-07
  %v542 = vadd.f32 %v458, 1e-07
  %v543 = vadd.f32 %v465, 1e-07
  %v544 = vadd.f32 %v472, 1e-07
  %v545 = vadd.f32 %v479, 1e-07
  %v546 = vadd.f32 %v486, 1e-07
  %v547 = vadd.f32 %v493, 1e-07
  %v548 = vadd.f32 %v500, 1e-07
  %v549 = vadd.f32 %v507, 1e-07
  %v550 = vadd.f32 %v514, 1e-07
  %v551 = vrcp.pop %v542
  %v552 = vmul.f32 %v533, %v551
  %v553 = vrcp.pop %v543
  %v554 = vmul.f32 %v534, %v553
  %v555 = vrcp.pop %v544
  %v556 = vmul.f32 %v535, %v555
  %v557 = vrcp.pop %v545
  %v558 = vmul.f32 %v536, %v557
  %v559 = vrcp.pop %v546
  %v560 = vmul.f32 %v537, %v559
  %v561 = vrcp.pop %v547
  %v562 = vmul.f32 %v538, %v561
  %v563 = vrcp.pop %v548
  %v564 = vmul.f32 %v539, %v563
  %v565 = vrcp.pop %v549
  %v566 = vmul.f32 %v540, %v565
  %v567 = vrcp.pop %v550
  %v568 = vmul.f32 %v541, %v567
  %v569 = vlog2.pop %v552
  %v570 = vmul.f32 %v569, 0.6931472
  %v571 = vlog2.pop %v554
  %v572 = vmul.f32 %v571, 0.6931472
  %v573 = vlog2.pop %v556
  %v574 = vmul.f32 %v573, 0.6931472
  %v575 = vlog2.pop %v558
  %v576 = vmul.f32 %v575, 0.6931472
  %v577 = vlog2.pop %v560
  %v578 = vmul.f32 %v577, 0.6931472
  %v579 = vlog2.pop %v562
  %v580 = vmul.f32 %v579, 0.6931472
  %v581 = vlog2.pop %v564
  %v582 = vmul.f32 %v581, 0.6931472
  %v583 = vlog2.pop %v566
  %v584 = vmul.f32 %v583, 0.6931472
  %v585 = vlog2.pop %v568
  %v586 = vmul.f32 %v585, 0.6931472
  %v587 = vand.u32 2147483647, %v570
  %v588 = vand.u32 2147483647, %v572
  %v589 = vand.u32 2147483647, %v574
  %v590 = vand.u32 2147483647, %v576
  %v591 = vand.u32 2147483647, %v578
  %v592 = vand.u32 2147483647, %v580
  %v593 = vand.u32 2147483647, %v582
  %v594 = vand.u32 2147483647, %v584
  %v595 = vand.u32 2147483647, %v586
  %v596 = vadd.f32 %v524, %v525
  %v597 = vadd.f32 %v596, %v526
  %v598 = vadd.f32 %v597, %v527
  %v599 = vadd.f32 %v598, %v528
  %v600 = vadd.f32 %v599, %v529
  %v601 = vadd.f32 %v600, %v530
  %v602 = vadd.f32 %v601, %v531
  %v603 = vadd.f32 %v602, %v532
  %604 = vst [vmem:[%s3] sm:$0xff] %v603
  %v605 = vadd.f32 %v587, %v588
  %v606 = vadd.f32 %v605, %v589
  %v607 = vadd.f32 %v606, %v590
  %v608 = vadd.f32 %v607, %v591
  %v609 = vadd.f32 %v608, %v592
  %v610 = vadd.f32 %v609, %v593
  %v611 = vadd.f32 %v610, %v594
  %v612 = vadd.f32 %v611, %v595
  %613 = vst [vmem:[%s4] sm:$0xff] %v612
  // Predicated region
  $region14: #{_forward.4} parent=0 // pred_check
    _
  $region15: #{_forward.4} parent=0 // pred_check_branch
    %615 = sbr.rel (0) target = $region17
  $region16: #{_forward.4} parent=0 // pred_region
    _
  $region17: #{_forward.4} parent=0 // pred_fallthru
    _
  // Predicated region
  $region18: #{_forward.4} parent=0 // pred_check
    _
  $region19: #{_forward.4} parent=0 // pred_check_branch
    %617 = sbr.rel (0) target = $region21
  $region20: #{_forward.4} parent=0 // pred_region
    _
  $region21: #{_forward.4} parent=0 // pred_fallthru
    _
  // Predicated region
  $region22: #{_forward.4} parent=0 // pred_check
    _
  $region23: #{_forward.4} parent=0 // pred_check_branch
    %619 = sbr.rel (0) target = $region25
  $region24: #{_forward.4} parent=0 // pred_region
    _
  $region25: #{_forward.4} parent=0 // pred_fallthru
    _
  // Predicated region
  $region26: #{_forward.4} parent=0 // pred_check
    _
  $region27: #{_forward.4} parent=0 // pred_check_branch
    %621 = sbr.rel (0) target = $region29
  $region28: #{_forward.4} parent=0 // pred_region
    _
  $region29: #{_forward.4} parent=0 // pred_fallthru
    _

// kernel: _forward.5
$region0: #{_forward.5}
  #allocation0 [shape = 'u32[]', space=smem, size = 0x4, offset = 0x4, fixed_abs, tag = 'smem constant byte address 0x4 - core index']
  #allocation1 [shape = 'u32[144,128]{1,0:T(1,128)}', space=vmem, size = 0x12000, scoped, tag = 'internal scratch']
  %s0 = inlined_call_operand.vmem [shape: f32[136,16], index: 0, kind: input, shape index: {}]
  %s1 = inlined_call_operand.vmem [shape: f32[136,16], index: 1, kind: input, shape index: {}]
  %s2 = inlined_call_operand.vmem [shape: f32[16,256], index: 2, kind: input, shape index: {}]
  %s3 = inlined_call_operand.vmem [shape: f32[1,8,128], index: 3, kind: output, shape index: {0}]
  %s4 = inlined_call_operand.vmem [shape: f32[1,8,128], index: 4, kind: output, shape index: {1}]
  %5 = xla_tuple %s3, %s4
  %s6 = sld [smem:[#allocation0]]
  $region30: #{_forward.5} parent=0
    _
  %s8 = ssub.s32 1, %s6
  %s9 = scalar_select 0, %s8, %s6
  // Predicated region
  $region2: #{_forward.5} parent=0 // pred_check
    _
  $region3: #{_forward.5} parent=0 // pred_check_branch
    %11 = sbr.rel (0) target = $region5
  $region4: #{_forward.5} parent=0 // pred_region
    _
  $region5: #{_forward.5} parent=0 // pred_fallthru
    _
  // Predicated region
  $region6: #{_forward.5} parent=0 // pred_check
    _
  $region7: #{_forward.5} parent=0 // pred_check_branch
    %13 = sbr.rel (0) target = $region9
  $region8: #{_forward.5} parent=0 // pred_region
    _
  $region9: #{_forward.5} parent=0 // pred_fallthru
    _
  // Predicated region
  $region10: #{_forward.5} parent=0 // pred_check
    _
  $region11: #{_forward.5} parent=0 // pred_check_branch
    %15 = sbr.rel (0) target = $region13
  $region12: #{_forward.5} parent=0 // pred_region
    _
  $region13: #{_forward.5} parent=0 // pred_fallthru
    _
  %v16 = vld [vmem:[%s2] sm:$0xff]
  %v17 = vld [vmem:[%s2 + $0x8] sm:$0xff]
  %v18 = vld [vmem:[%s2 + $0x10] sm:$0xff]
  %v19 = vld [vmem:[%s2 + $0x18] sm:$0xff]
  %v20 = vld [vmem:[%s0] sm:$0xff]
  %v21 = vld [vmem:[%s0 + $0x8] sm:$0xff]
  %v22 = vld [vmem:[%s0 + $0x10] sm:$0xff]
  %v23 = vld [vmem:[%s0 + $0x18] sm:$0xff]
  %v24 = vld [vmem:[%s0 + $0x20] sm:$0xff]
  %v25 = vld [vmem:[%s0 + $0x28] sm:$0xff]
  %v26 = vld [vmem:[%s0 + $0x30] sm:$0xff]
  %v27 = vld [vmem:[%s0 + $0x38] sm:$0xff]
  %v28 = vld [vmem:[%s0 + $0x40] sm:$0xff]
  %v29 = vld [vmem:[%s0 + $0x48] sm:$0xff]
  %v30 = vld [vmem:[%s0 + $0x50] sm:$0xff]
  %v31 = vld [vmem:[%s0 + $0x58] sm:$0xff]
  %v32 = vld [vmem:[%s0 + $0x60] sm:$0xff]
  %v33 = vld [vmem:[%s0 + $0x68] sm:$0xff]
  %v34 = vld [vmem:[%s0 + $0x70] sm:$0xff]
  %v35 = vld [vmem:[%s0 + $0x78] sm:$0xff]
  %v36 = vld [vmem:[%s0 + $0x80] sm:$0xff]
  %vm37 = vcmask 130048
  %v39 = vsel %vm37, %v20, 0
  %v42 = vsel %vm37, %v21, 0
  %v45 = vsel %vm37, %v22, 0
  %v48 = vsel %vm37, %v23, 0
  %v51 = vsel %vm37, %v24, 0
  %v54 = vsel %vm37, %v25, 0
  %v57 = vsel %vm37, %v26, 0
  %v60 = vsel %vm37, %v27, 0
  %v63 = vsel %vm37, %v28, 0
  %v66 = vsel %vm37, %v29, 0
  %v69 = vsel %vm37, %v30, 0
  %v72 = vsel %vm37, %v31, 0
  %v75 = vsel %vm37, %v32, 0
  %v78 = vsel %vm37, %v33, 0
  %v81 = vsel %vm37, %v34, 0
  %v84 = vsel %vm37, %v35, 0
  %v87 = vsel %vm37, %v36, 0
  %89 = vmatprep.subr.mxu0 %v17
  %90 = vmatpush1.msra.mxu0 %v16
  %91 = vmatprep.subr.mxu0 %v19
  %92 = vmatpush1.msra.mxu0 %v18
  %93 = vmatprep.subr.mxu0 0.0
  %94 = vmatpush1.msra.mxu0 0.0
  %95 = vmatprep.subr.mxu0 0.0
  %96 = vmatpush1.msra.mxu0 0.0
  %97 = vmatprep.subr.mxu0 0.0
  %98 = vmatpush1.msra.mxu0 0.0
  %99 = vmatprep.subr.mxu0 0.0
  %100 = vmatpush1.msra.mxu0 0.0
  %101 = vmatprep.subr.mxu0 0.0
  %102 = vmatpush1.msra.mxu0 0.0
  %103 = vmatprep.subr.mxu0 0.0
  %104 = vmatpush1.msra.mxu0 0.0
  %105 = vmatprep.subr.mxu0 0.0
  %106 = vmatpush1.msra.mxu0 0.0
  %107 = vmatprep.subr.mxu0 0.0
  %108 = vmatpush1.msra.mxu0 0.0
  %109 = vmatprep.subr.mxu0 0.0
  %110 = vmatpush1.msra.mxu0 0.0
  %111 = vmatprep.subr.mxu0 0.0
  %112 = vmatpush1.msra.mxu0 0.0
  %113 = vmatprep.subr.mxu0 0.0
  %114 = vmatpush1.msra.mxu0 0.0
  %115 = vmatprep.subr.mxu0 0.0
  %116 = vmatpush1.msra.mxu0 0.0
  %117 = vmatprep.subr.mxu0 0.0
  %118 = vmatpush1.msra.mxu0 0.0
  %119 = vmatprep.subr.mxu0 0.0
  %120 = vmatpush1.msra.mxu0 0.0
  %121 = vmatprep.subr.mxu0 0.0
  %122 = vmatpush1.msra.mxu0 0.0
  %123 = vmatprep.subr.mxu0 0.0
  %124 = vmatpush1.msra.mxu0 0.0
  %125 = vmatprep.subr.mxu0 0.0
  %126 = vmatpush1.msra.mxu0 0.0
  %127 = vmatprep.subr.mxu0 0.0
  %128 = vmatpush1.msra.mxu0 0.0
  %129 = vmatprep.subr.mxu0 0.0
  %130 = vmatpush1.msra.mxu0 0.0
  %131 = vmatprep.subr.mxu0 0.0
  %132 = vmatpush1.msra.mxu0 0.0
  %133 = vmatprep.subr.mxu0 0.0
  %134 = vmatpush1.msra.mxu0 0.0
  %135 = vmatprep.subr.mxu0 0.0
  %136 = vmatpush1.msra.mxu0 0.0
  %137 = vmatprep.subr.mxu0 0.0
  %138 = vmatpush1.msra.mxu0 0.0
  %139 = vmatprep.subr.mxu0 0.0
  %140 = vmatpush1.msra.mxu0 0.0
  %141 = vmatprep.subr.mxu0 0.0
  %142 = vmatpush1.msra.mxu0 0.0
  %143 = vmatprep.subr.mxu0 0.0
  %144 = vmatpush1.msra.mxu0 0.0
  %145 = vmatprep.subr.mxu0 0.0
  %146 = vmatpush1.msra.mxu0 0.0
  %147 = vmatprep.subr.mxu0 0.0
  %148 = vmatpush1.msra.mxu0 0.0
  %149 = vmatprep.subr.mxu0 0.0
  %150 = vmatpush1.msra.mxu0 0.0
  %151 = vmatprep.subr.mxu0 0.0
  %152 = vmatpush1.msra.mxu0 0.0
  %153 = vmatprep.mubr.f32.mxu0 0.0
  %154 = vmatmul.mubr.f32.gmra.mrb[0].mxu0 %v39
  %v155 = vpop.f32.mrb[0].mxu0
  %v156 = vadd.f32 0.0, %v155
  %v157 = vpop.f32.mrb[0].mxu0
  %v158 = vadd.f32 0.0, %v157
  %159 = vmatprep.mubr.f32.mxu0 0.0
  %160 = vmatmul.mubr.f32.gmra.mrb[0].mxu0 %v42
  %v161 = vpop.f32.mrb[0].mxu0
  %v162 = vadd.f32 0.0, %v161
  %v163 = vpop.f32.mrb[0].mxu0
  %v164 = vadd.f32 0.0, %v163
  %165 = vmatprep.mubr.f32.mxu0 0.0
  %166 = vmatmul.mubr.f32.gmra.mrb[0].mxu0 %v45
  %v167 = vpop.f32.mrb[0].mxu0
  %v168 = vadd.f32 0.0, %v167
  %v169 = vpop.f32.mrb[0].mxu0
  %v170 = vadd.f32 0.0, %v169
  %171 = vmatprep.mubr.f32.mxu0 0.0
  %172 = vmatmul.mubr.f32.gmra.mrb[0].mxu0 %v48
  %v173 = vpop.f32.mrb[0].mxu0
  %v174 = vadd.f32 0.0, %v173
  %v175 = vpop.f32.mrb[0].mxu0
  %v176 = vadd.f32 0.0, %v175
  %177 = vmatprep.mubr.f32.mxu0 0.0
  %178 = vmatmul.mubr.f32.gmra.mrb[0].mxu0 %v51
  %v179 = vpop.f32.mrb[0].mxu0
  %v180 = vadd.f32 0.0, %v179
  %v181 = vpop.f32.mrb[0].mxu0
  %v182 = vadd.f32 0.0, %v181
  %183 = vmatprep.mubr.f32.mxu0 0.0
  %184 = vmatmul.mubr.f32.gmra.mrb[0].mxu0 %v54
  %v185 = vpop.f32.mrb[0].mxu0
  %v186 = vadd.f32 0.0, %v185
  %v187 = vpop.f32.mrb[0].mxu0
  %v188 = vadd.f32 0.0, %v187
  %189 = vmatprep.mubr.f32.mxu0 0.0
  %190 = vmatmul.mubr.f32.gmra.mrb[0].mxu0 %v57
  %v191 = vpop.f32.mrb[0].mxu0
  %v192 = vadd.f32 0.0, %v191
  %v193 = vpop.f32.mrb[0].mxu0
  %v194 = vadd.f32 0.0, %v193
  %195 = vmatprep.mubr.f32.mxu0 0.0
  %196 = vmatmul.mubr.f32.gmra.mrb[0].mxu0 %v60
  %v197 = vpop.f32.mrb[0].mxu0
  %v198 = vadd.f32 0.0, %v197
  %v199 = vpop.f32.mrb[0].mxu0
  %v200 = vadd.f32 0.0, %v199
  %201 = vmatprep.mubr.f32.mxu0 0.0
  %202 = vmatmul.mubr.f32.gmra.mrb[0].mxu0 %v63
  %v203 = vpop.f32.mrb[0].mxu0
  %v204 = vadd.f32 0.0, %v203
  %v205 = vpop.f32.mrb[0].mxu0
  %v206 = vadd.f32 0.0, %v205
  %207 = vmatprep.mubr.f32.mxu0 0.0
  %208 = vmatmul.mubr.f32.gmra.mrb[0].mxu0 %v66
  %v209 = vpop.f32.mrb[0].mxu0
  %v210 = vadd.f32 0.0, %v209
  %v211 = vpop.f32.mrb[0].mxu0
  %v212 = vadd.f32 0.0, %v211
  %213 = vmatprep.mubr.f32.mxu0 0.0
  %214 = vmatmul.mubr.f32.gmra.mrb[0].mxu0 %v69
  %v215 = vpop.f32.mrb[0].mxu0
  %v216 = vadd.f32 0.0, %v215
  %v217 = vpop.f32.mrb[0].mxu0
  %v218 = vadd.f32 0.0, %v217
  %219 = vmatprep.mubr.f32.mxu0 0.0
  %220 = vmatmul.mubr.f32.gmra.mrb[0].mxu0 %v72
  %v221 = vpop.f32.mrb[0].mxu0
  %v222 = vadd.f32 0.0, %v221
  %v223 = vpop.f32.mrb[0].mxu0
  %v224 = vadd.f32 0.0, %v223
  %225 = vmatprep.mubr.f32.mxu0 0.0
  %226 = vmatmul.mubr.f32.gmra.mrb[0].mxu0 %v75
  %v227 = vpop.f32.mrb[0].mxu0
  %v228 = vadd.f32 0.0, %v227
  %v229 = vpop.f32.mrb[0].mxu0
  %v230 = vadd.f32 0.0, %v229
  %231 = vmatprep.mubr.f32.mxu0 0.0
  %232 = vmatmul.mubr.f32.gmra.mrb[0].mxu0 %v78
  %v233 = vpop.f32.mrb[0].mxu0
  %v234 = vadd.f32 0.0, %v233
  %v235 = vpop.f32.mrb[0].mxu0
  %v236 = vadd.f32 0.0, %v235
  %237 = vmatprep.mubr.f32.mxu0 0.0
  %238 = vmatmul.mubr.f32.gmra.mrb[0].mxu0 %v81
  %v239 = vpop.f32.mrb[0].mxu0
  %v240 = vadd.f32 0.0, %v239
  %v241 = vpop.f32.mrb[0].mxu0
  %v242 = vadd.f32 0.0, %v241
  %243 = vmatprep.mubr.f32.mxu0 0.0
  %244 = vmatmul.mubr.f32.gmra.mrb[0].mxu0 %v84
  %v245 = vpop.f32.mrb[0].mxu0
  %v246 = vadd.f32 0.0, %v245
  %v247 = vpop.f32.mrb[0].mxu0
  %v248 = vadd.f32 0.0, %v247
  %249 = vmatprep.mubr.f32.mxu0 0.0
  %250 = vmatmul.mubr.f32.gmra.mrb[0].mxu0 %v87
  %v251 = vpop.f32.mrb[0].mxu0
  %v252 = vadd.f32 0.0, %v251
  %v253 = vpop.f32.mrb[0].mxu0
  %v254 = vadd.f32 0.0, %v253
  %255 = vdwg.mxu0
  %v256 = vld [vmem:[%s1] sm:$0xff]
  %v257 = vld [vmem:[%s1 + $0x8] sm:$0xff]
  %v258 = vld [vmem:[%s1 + $0x10] sm:$0xff]
  %v259 = vld [vmem:[%s1 + $0x18] sm:$0xff]
  %v260 = vld [vmem:[%s1 + $0x20] sm:$0xff]
  %v261 = vld [vmem:[%s1 + $0x28] sm:$0xff]
  %v262 = vld [vmem:[%s1 + $0x30] sm:$0xff]
  %v263 = vld [vmem:[%s1 + $0x38] sm:$0xff]
  %v264 = vld [vmem:[%s1 + $0x40] sm:$0xff]
  %v265 = vld [vmem:[%s1 + $0x48] sm:$0xff]
  %v266 = vld [vmem:[%s1 + $0x50] sm:$0xff]
  %v267 = vld [vmem:[%s1 + $0x58] sm:$0xff]
  %v268 = vld [vmem:[%s1 + $0x60] sm:$0xff]
  %v269 = vld [vmem:[%s1 + $0x68] sm:$0xff]
  %v270 = vld [vmem:[%s1 + $0x70] sm:$0xff]
  %v271 = vld [vmem:[%s1 + $0x78] sm:$0xff]
  %v272 = vld [vmem:[%s1 + $0x80] sm:$0xff]
  %v274 = vsel %vm37, %v256, 0
  %v277 = vsel %vm37, %v257, 0
  %v280 = vsel %vm37, %v258, 0
  %v283 = vsel %vm37, %v259, 0
  %v286 = vsel %vm37, %v260, 0
  %v289 = vsel %vm37, %v261, 0
  %v292 = vsel %vm37, %v262, 0
  %v295 = vsel %vm37, %v263, 0
  %v298 = vsel %vm37, %v264, 0
  %v301 = vsel %vm37, %v265, 0
  %v304 = vsel %vm37, %v266, 0
  %v307 = vsel %vm37, %v267, 0
  %v310 = vsel %vm37, %v268, 0
  %v313 = vsel %vm37, %v269, 0
  %v316 = vsel %vm37, %v270, 0
  %v319 = vsel %vm37, %v271, 0
  %v322 = vsel %vm37, %v272, 0
  %324 = vmatprep.subr.mxu0 %v17
  %325 = vmatpush1.msra.mxu0 %v16
  %326 = vmatprep.subr.mxu0 %v19
  %327 = vmatpush1.msra.mxu0 %v18
  %328 = vmatprep.subr.mxu0 0.0
  %329 = vmatpush1.msra.mxu0 0.0
  %330 = vmatprep.subr.mxu0 0.0
  %331 = vmatpush1.msra.mxu0 0.0
  %332 = vmatprep.subr.mxu0 0.0
  %333 = vmatpush1.msra.mxu0 0.0
  %334 = vmatprep.subr.mxu0 0.0
  %335 = vmatpush1.msra.mxu0 0.0
  %336 = vmatprep.subr.mxu0 0.0
  %337 = vmatpush1.msra.mxu0 0.0
  %338 = vmatprep.subr.mxu0 0.0
  %339 = vmatpush1.msra.mxu0 0.0
  %340 = vmatprep.subr.mxu0 0.0
  %341 = vmatpush1.msra.mxu0 0.0
  %342 = vmatprep.subr.mxu0 0.0
  %343 = vmatpush1.msra.mxu0 0.0
  %344 = vmatprep.subr.mxu0 0.0
  %345 = vmatpush1.msra.mxu0 0.0
  %346 = vmatprep.subr.mxu0 0.0
  %347 = vmatpush1.msra.mxu0 0.0
  %348 = vmatprep.subr.mxu0 0.0
  %349 = vmatpush1.msra.mxu0 0.0
  %350 = vmatprep.subr.mxu0 0.0
  %351 = vmatpush1.msra.mxu0 0.0
  %352 = vmatprep.subr.mxu0 0.0
  %353 = vmatpush1.msra.mxu0 0.0
  %354 = vmatprep.subr.mxu0 0.0
  %355 = vmatpush1.msra.mxu0 0.0
  %356 = vmatprep.subr.mxu0 0.0
  %357 = vmatpush1.msra.mxu0 0.0
  %358 = vmatprep.subr.mxu0 0.0
  %359 = vmatpush1.msra.mxu0 0.0
  %360 = vmatprep.subr.mxu0 0.0
  %361 = vmatpush1.msra.mxu0 0.0
  %362 = vmatprep.subr.mxu0 0.0
  %363 = vmatpush1.msra.mxu0 0.0
  %364 = vmatprep.subr.mxu0 0.0
  %365 = vmatpush1.msra.mxu0 0.0
  %366 = vmatprep.subr.mxu0 0.0
  %367 = vmatpush1.msra.mxu0 0.0
  %368 = vmatprep.subr.mxu0 0.0
  %369 = vmatpush1.msra.mxu0 0.0
  %370 = vmatprep.subr.mxu0 0.0
  %371 = vmatpush1.msra.mxu0 0.0
  %372 = vmatprep.subr.mxu0 0.0
  %373 = vmatpush1.msra.mxu0 0.0
  %374 = vmatprep.subr.mxu0 0.0
  %375 = vmatpush1.msra.mxu0 0.0
  %376 = vmatprep.subr.mxu0 0.0
  %377 = vmatpush1.msra.mxu0 0.0
  %378 = vmatprep.subr.mxu0 0.0
  %379 = vmatpush1.msra.mxu0 0.0
  %380 = vmatprep.subr.mxu0 0.0
  %381 = vmatpush1.msra.mxu0 0.0
  %382 = vmatprep.subr.mxu0 0.0
  %383 = vmatpush1.msra.mxu0 0.0
  %384 = vmatprep.subr.mxu0 0.0
  %385 = vmatpush1.msra.mxu0 0.0
  %386 = vmatprep.subr.mxu0 0.0
  %387 = vmatpush1.msra.mxu0 0.0
  %388 = vmatprep.mubr.f32.mxu0 0.0
  %389 = vmatmul.mubr.f32.gmra.mrb[0].mxu0 %v274
  %v390 = vpop.f32.mrb[0].mxu0
  %v391 = vadd.f32 0.0, %v390
  %v392 = vpop.f32.mrb[0].mxu0
  %v393 = vadd.f32 0.0, %v392
  %394 = vmatprep.mubr.f32.mxu0 0.0
  %395 = vmatmul.mubr.f32.gmra.mrb[0].mxu0 %v277
  %v396 = vpop.f32.mrb[0].mxu0
  %v397 = vadd.f32 0.0, %v396
  %v398 = vpop.f32.mrb[0].mxu0
  %v399 = vadd.f32 0.0, %v398
  %400 = vmatprep.mubr.f32.mxu0 0.0
  %401 = vmatmul.mubr.f32.gmra.mrb[0].mxu0 %v280
  %v402 = vpop.f32.mrb[0].mxu0
  %v403 = vadd.f32 0.0, %v402
  %v404 = vpop.f32.mrb[0].mxu0
  %v405 = vadd.f32 0.0, %v404
  %406 = vmatprep.mubr.f32.mxu0 0.0
  %407 = vmatmul.mubr.f32.gmra.mrb[0].mxu0 %v283
  %v408 = vpop.f32.mrb[0].mxu0
  %v409 = vadd.f32 0.0, %v408
  %v410 = vpop.f32.mrb[0].mxu0
  %v411 = vadd.f32 0.0, %v410
  %412 = vmatprep.mubr.f32.mxu0 0.0
  %413 = vmatmul.mubr.f32.gmra.mrb[0].mxu0 %v286
  %v414 = vpop.f32.mrb[0].mxu0
  %v415 = vadd.f32 0.0, %v414
  %v416 = vpop.f32.mrb[0].mxu0
  %v417 = vadd.f32 0.0, %v416
  %418 = vmatprep.mubr.f32.mxu0 0.0
  %419 = vmatmul.mubr.f32.gmra.mrb[0].mxu0 %v289
  %v420 = vpop.f32.mrb[0].mxu0
  %v421 = vadd.f32 0.0, %v420
  %v422 = vpop.f32.mrb[0].mxu0
  %v423 = vadd.f32 0.0, %v422
  %424 = vmatprep.mubr.f32.mxu0 0.0
  %425 = vmatmul.mubr.f32.gmra.mrb[0].mxu0 %v292
  %v426 = vpop.f32.mrb[0].mxu0
  %v427 = vadd.f32 0.0, %v426
  %v428 = vpop.f32.mrb[0].mxu0
  %v429 = vadd.f32 0.0, %v428
  %430 = vmatprep.mubr.f32.mxu0 0.0
  %431 = vmatmul.mubr.f32.gmra.mrb[0].mxu0 %v295
  %v432 = vpop.f32.mrb[0].mxu0
  %v433 = vadd.f32 0.0, %v432
  %v434 = vpop.f32.mrb[0].mxu0
  %v435 = vadd.f32 0.0, %v434
  %436 = vmatprep.mubr.f32.mxu0 0.0
  %437 = vmatmul.mubr.f32.gmra.mrb[0].mxu0 %v298
  %v438 = vpop.f32.mrb[0].mxu0
  %v439 = vadd.f32 0.0, %v438
  %v440 = vpop.f32.mrb[0].mxu0
  %v441 = vadd.f32 0.0, %v440
  %442 = vmatprep.mubr.f32.mxu0 0.0
  %443 = vmatmul.mubr.f32.gmra.mrb[0].mxu0 %v301
  %v444 = vpop.f32.mrb[0].mxu0
  %v445 = vadd.f32 0.0, %v444
  %v446 = vpop.f32.mrb[0].mxu0
  %v447 = vadd.f32 0.0, %v446
  %448 = vmatprep.mubr.f32.mxu0 0.0
  %449 = vmatmul.mubr.f32.gmra.mrb[0].mxu0 %v304
  %v450 = vpop.f32.mrb[0].mxu0
  %v451 = vadd.f32 0.0, %v450
  %v452 = vpop.f32.mrb[0].mxu0
  %v453 = vadd.f32 0.0, %v452
  %454 = vmatprep.mubr.f32.mxu0 0.0
  %455 = vmatmul.mubr.f32.gmra.mrb[0].mxu0 %v307
  %v456 = vpop.f32.mrb[0].mxu0
  %v457 = vadd.f32 0.0, %v456
  %v458 = vpop.f32.mrb[0].mxu0
  %v459 = vadd.f32 0.0, %v458
  %460 = vmatprep.mubr.f32.mxu0 0.0
  %461 = vmatmul.mubr.f32.gmra.mrb[0].mxu0 %v310
  %v462 = vpop.f32.mrb[0].mxu0
  %v463 = vadd.f32 0.0, %v462
  %v464 = vpop.f32.mrb[0].mxu0
  %v465 = vadd.f32 0.0, %v464
  %466 = vmatprep.mubr.f32.mxu0 0.0
  %467 = vmatmul.mubr.f32.gmra.mrb[0].mxu0 %v313
  %v468 = vpop.f32.mrb[0].mxu0
  %v469 = vadd.f32 0.0, %v468
  %v470 = vpop.f32.mrb[0].mxu0
  %v471 = vadd.f32 0.0, %v470
  %472 = vmatprep.mubr.f32.mxu0 0.0
  %473 = vmatmul.mubr.f32.gmra.mrb[0].mxu0 %v316
  %v474 = vpop.f32.mrb[0].mxu0
  %v475 = vadd.f32 0.0, %v474
  %v476 = vpop.f32.mrb[0].mxu0
  %v477 = vadd.f32 0.0, %v476
  %478 = vmatprep.mubr.f32.mxu0 0.0
  %479 = vmatmul.mubr.f32.gmra.mrb[0].mxu0 %v319
  %v480 = vpop.f32.mrb[0].mxu0
  %v481 = vadd.f32 0.0, %v480
  %v482 = vpop.f32.mrb[0].mxu0
  %v483 = vadd.f32 0.0, %v482
  %484 = vmatprep.mubr.f32.mxu0 0.0
  %485 = vmatmul.mubr.f32.gmra.mrb[0].mxu0 %v322
  %v486 = vpop.f32.mrb[0].mxu0
  %v487 = vadd.f32 0.0, %v486
  %v488 = vpop.f32.mrb[0].mxu0
  %v489 = vadd.f32 0.0, %v488
  %490 = vdwg.mxu0
  %v491 = vmul.f32 %v156, %v156
  %v492 = vmul.f32 %v162, %v162
  %v493 = vmul.f32 %v168, %v168
  %v494 = vmul.f32 %v174, %v174
  %v495 = vmul.f32 %v180, %v180
  %v496 = vmul.f32 %v186, %v186
  %v497 = vmul.f32 %v192, %v192
  %v498 = vmul.f32 %v198, %v198
  %v499 = vmul.f32 %v204, %v204
  %v500 = vmul.f32 %v210, %v210
  %v501 = vmul.f32 %v216, %v216
  %v502 = vmul.f32 %v222, %v222
  %v503 = vmul.f32 %v228, %v228
  %v504 = vmul.f32 %v234, %v234
  %v505 = vmul.f32 %v240, %v240
  %v506 = vmul.f32 %v246, %v246
  %v507 = vmul.f32 %v252, %v252
  %v508 = vmul.f32 %v158, %v158
  %v509 = vmul.f32 %v164, %v164
  %v510 = vmul.f32 %v170, %v170
  %v511 = vmul.f32 %v176, %v176
  %v512 = vmul.f32 %v182, %v182
  %v513 = vmul.f32 %v188, %v188
  %v514 = vmul.f32 %v194, %v194
  %v515 = vmul.f32 %v200, %v200
  %v516 = vmul.f32 %v206, %v206
  %v517 = vmul.f32 %v212, %v212
  %v518 = vmul.f32 %v218, %v218
  %v519 = vmul.f32 %v224, %v224
  %v520 = vmul.f32 %v230, %v230
  %v521 = vmul.f32 %v236, %v236
  %v522 = vmul.f32 %v242, %v242
  %v523 = vmul.f32 %v248, %v248
  %v524 = vmul.f32 %v254, %v254
  %v525 = vadd.f32 %v491, %v508
  %v526 = vadd.f32 %v492, %v509
  %v527 = vadd.f32 %v493, %v510
  %v528 = vadd.f32 %v494, %v511
  %v529 = vadd.f32 %v495, %v512
  %v530 = vadd.f32 %v496, %v513
  %v531 = vadd.f32 %v497, %v514
  %v532 = vadd.f32 %v498, %v515
  %v533 = vadd.f32 %v499, %v516
  %v534 = vadd.f32 %v500, %v517
  %v535 = vadd.f32 %v501, %v518
  %v536 = vadd.f32 %v502, %v519
  %v537 = vadd.f32 %v503, %v520
  %v538 = vadd.f32 %v504, %v521
  %v539 = vadd.f32 %v505, %v522
  %v540 = vadd.f32 %v506, %v523
  %v541 = vadd.f32 %v507, %v524
  %v542 = vrsqrt.pop %v525
  %v543 = vmul.f32 %v525, %v542
  %vm544 = vcmp.eq.f32.partialorder %v525, inf
  %v545 = vsel %vm544, %v525, %v543
  %vm546 = vcmp.eq.f32.partialorder %v525, 0.0
  %v547 = vand.u32 %v525, 2147483648
  %v548 = vsel %vm546, %v547, %v545
  %v549 = vrsqrt.pop %v526
  %v550 = vmul.f32 %v526, %v549
  %vm551 = vcmp.eq.f32.partialorder %v526, inf
  %v552 = vsel %vm551, %v526, %v550
  %vm553 = vcmp.eq.f32.partialorder %v526, 0.0
  %v554 = vand.u32 %v526, 2147483648
  %v555 = vsel %vm553, %v554, %v552
  %v556 = vrsqrt.pop %v527
  %v557 = vmul.f32 %v527, %v556
  %vm558 = vcmp.eq.f32.partialorder %v527, inf
  %v559 = vsel %vm558, %v527, %v557
  %vm560 = vcmp.eq.f32.partialorder %v527, 0.0
  %v561 = vand.u32 %v527, 2147483648
  %v562 = vsel %vm560, %v561, %v559
  %v563 = vrsqrt.pop %v528
  %v564 = vmul.f32 %v528, %v563
  %vm565 = vcmp.eq.f32.partialorder %v528, inf
  %v566 = vsel %vm565, %v528, %v564
  %vm567 = vcmp.eq.f32.partialorder %v528, 0.0
  %v568 = vand.u32 %v528, 2147483648
  %v569 = vsel %vm567, %v568, %v566
  %v570 = vrsqrt.pop %v529
  %v571 = vmul.f32 %v529, %v570
  %vm572 = vcmp.eq.f32.partialorder %v529, inf
  %v573 = vsel %vm572, %v529, %v571
  %vm574 = vcmp.eq.f32.partialorder %v529, 0.0
  %v575 = vand.u32 %v529, 2147483648
  %v576 = vsel %vm574, %v575, %v573
  %v577 = vrsqrt.pop %v530
  %v578 = vmul.f32 %v530, %v577
  %vm579 = vcmp.eq.f32.partialorder %v530, inf
  %v580 = vsel %vm579, %v530, %v578
  %vm581 = vcmp.eq.f32.partialorder %v530, 0.0
  %v582 = vand.u32 %v530, 2147483648
  %v583 = vsel %vm581, %v582, %v580
  %v584 = vrsqrt.pop %v531
  %v585 = vmul.f32 %v531, %v584
  %vm586 = vcmp.eq.f32.partialorder %v531, inf
  %v587 = vsel %vm586, %v531, %v585
  %vm588 = vcmp.eq.f32.partialorder %v531, 0.0
  %v589 = vand.u32 %v531, 2147483648
  %v590 = vsel %vm588, %v589, %v587
  %v591 = vrsqrt.pop %v532
  %v592 = vmul.f32 %v532, %v591
  %vm593 = vcmp.eq.f32.partialorder %v532, inf
  %v594 = vsel %vm593, %v532, %v592
  %vm595 = vcmp.eq.f32.partialorder %v532, 0.0
  %v596 = vand.u32 %v532, 2147483648
  %v597 = vsel %vm595, %v596, %v594
  %v598 = vrsqrt.pop %v533
  %v599 = vmul.f32 %v533, %v598
  %vm600 = vcmp.eq.f32.partialorder %v533, inf
  %v601 = vsel %vm600, %v533, %v599
  %vm602 = vcmp.eq.f32.partialorder %v533, 0.0
  %v603 = vand.u32 %v533, 2147483648
  %v604 = vsel %vm602, %v603, %v601
  %v605 = vrsqrt.pop %v534
  %v606 = vmul.f32 %v534, %v605
  %vm607 = vcmp.eq.f32.partialorder %v534, inf
  %v608 = vsel %vm607, %v534, %v606
  %vm609 = vcmp.eq.f32.partialorder %v534, 0.0
  %v610 = vand.u32 %v534, 2147483648
  %v611 = vsel %vm609, %v610, %v608
  %v612 = vrsqrt.pop %v535
  %v613 = vmul.f32 %v535, %v612
  %vm614 = vcmp.eq.f32.partialorder %v535, inf
  %v615 = vsel %vm614, %v535, %v613
  %vm616 = vcmp.eq.f32.partialorder %v535, 0.0
  %v617 = vand.u32 %v535, 2147483648
  %v618 = vsel %vm616, %v617, %v615
  %v619 = vrsqrt.pop %v536
  %v620 = vmul.f32 %v536, %v619
  %vm621 = vcmp.eq.f32.partialorder %v536, inf
  %v622 = vsel %vm621, %v536, %v620
  %vm623 = vcmp.eq.f32.partialorder %v536, 0.0
  %v624 = vand.u32 %v536, 2147483648
  %v625 = vsel %vm623, %v624, %v622
  %v626 = vrsqrt.pop %v537
  %v627 = vmul.f32 %v537, %v626
  %vm628 = vcmp.eq.f32.partialorder %v537, inf
  %v629 = vsel %vm628, %v537, %v627
  %vm630 = vcmp.eq.f32.partialorder %v537, 0.0
  %v631 = vand.u32 %v537, 2147483648
  %v632 = vsel %vm630, %v631, %v629
  %v633 = vrsqrt.pop %v538
  %v634 = vmul.f32 %v538, %v633
  %vm635 = vcmp.eq.f32.partialorder %v538, inf
  %v636 = vsel %vm635, %v538, %v634
  %vm637 = vcmp.eq.f32.partialorder %v538, 0.0
  %v638 = vand.u32 %v538, 2147483648
  %v639 = vsel %vm637, %v638, %v636
  %v640 = vrsqrt.pop %v539
  %v641 = vmul.f32 %v539, %v640
  %vm642 = vcmp.eq.f32.partialorder %v539, inf
  %v643 = vsel %vm642, %v539, %v641
  %vm644 = vcmp.eq.f32.partialorder %v539, 0.0
  %v645 = vand.u32 %v539, 2147483648
  %v646 = vsel %vm644, %v645, %v643
  %v647 = vrsqrt.pop %v540
  %v648 = vmul.f32 %v540, %v647
  %vm649 = vcmp.eq.f32.partialorder %v540, inf
  %v650 = vsel %vm649, %v540, %v648
  %vm651 = vcmp.eq.f32.partialorder %v540, 0.0
  %v652 = vand.u32 %v540, 2147483648
  %v653 = vsel %vm651, %v652, %v650
  %v654 = vrsqrt.pop %v541
  %v655 = vmul.f32 %v541, %v654
  %vm656 = vcmp.eq.f32.partialorder %v541, inf
  %v657 = vsel %vm656, %v541, %v655
  %vm658 = vcmp.eq.f32.partialorder %v541, 0.0
  %v659 = vand.u32 %v541, 2147483648
  %v660 = vsel %vm658, %v659, %v657
  %v661 = vmul.f32 %v391, %v391
  %v662 = vmul.f32 %v397, %v397
  %v663 = vmul.f32 %v403, %v403
  %v664 = vmul.f32 %v409, %v409
  %v665 = vmul.f32 %v415, %v415
  %v666 = vmul.f32 %v421, %v421
  %v667 = vmul.f32 %v427, %v427
  %v668 = vmul.f32 %v433, %v433
  %v669 = vmul.f32 %v439, %v439
  %v670 = vmul.f32 %v445, %v445
  %v671 = vmul.f32 %v451, %v451
  %v672 = vmul.f32 %v457, %v457
  %v673 = vmul.f32 %v463, %v463
  %v674 = vmul.f32 %v469, %v469
  %v675 = vmul.f32 %v475, %v475
  %v676 = vmul.f32 %v481, %v481
  %v677 = vmul.f32 %v487, %v487
  %v678 = vmul.f32 %v393, %v393
  %v679 = vmul.f32 %v399, %v399
  %v680 = vmul.f32 %v405, %v405
  %v681 = vmul.f32 %v411, %v411
  %v682 = vmul.f32 %v417, %v417
  %v683 = vmul.f32 %v423, %v423
  %v684 = vmul.f32 %v429, %v429
  %v685 = vmul.f32 %v435, %v435
  %v686 = vmul.f32 %v441, %v441
  %v687 = vmul.f32 %v447, %v447
  %v688 = vmul.f32 %v453, %v453
  %v689 = vmul.f32 %v459, %v459
  %v690 = vmul.f32 %v465, %v465
  %v691 = vmul.f32 %v471, %v471
  %v692 = vmul.f32 %v477, %v477
  %v693 = vmul.f32 %v483, %v483
  %v694 = vmul.f32 %v489, %v489
  %v695 = vadd.f32 %v661, %v678
  %v696 = vadd.f32 %v662, %v679
  %v697 = vadd.f32 %v663, %v680
  %v698 = vadd.f32 %v664, %v681
  %v699 = vadd.f32 %v665, %v682
  %v700 = vadd.f32 %v666, %v683
  %v701 = vadd.f32 %v667, %v684
  %v702 = vadd.f32 %v668, %v685
  %v703 = vadd.f32 %v669, %v686
  %v704 = vadd.f32 %v670, %v687
  %v705 = vadd.f32 %v671, %v688
  %v706 = vadd.f32 %v672, %v689
  %v707 = vadd.f32 %v673, %v690
  %v708 = vadd.f32 %v674, %v691
  %v709 = vadd.f32 %v675, %v692
  %v710 = vadd.f32 %v676, %v693
  %v711 = vadd.f32 %v677, %v694
  %v712 = vrsqrt.pop %v695
  %v713 = vmul.f32 %v695, %v712
  %vm714 = vcmp.eq.f32.partialorder %v695, inf
  %v715 = vsel %vm714, %v695, %v713
  %vm716 = vcmp.eq.f32.partialorder %v695, 0.0
  %v717 = vand.u32 %v695, 2147483648
  %v718 = vsel %vm716, %v717, %v715
  %v719 = vrsqrt.pop %v696
  %v720 = vmul.f32 %v696, %v719
  %vm721 = vcmp.eq.f32.partialorder %v696, inf
  %v722 = vsel %vm721, %v696, %v720
  %vm723 = vcmp.eq.f32.partialorder %v696, 0.0
  %v724 = vand.u32 %v696, 2147483648
  %v725 = vsel %vm723, %v724, %v722
  %v726 = vrsqrt.pop %v697
  %v727 = vmul.f32 %v697, %v726
  %vm728 = vcmp.eq.f32.partialorder %v697, inf
  %v729 = vsel %vm728, %v697, %v727
  %vm730 = vcmp.eq.f32.partialorder %v697, 0.0
  %v731 = vand.u32 %v697, 2147483648
  %v732 = vsel %vm730, %v731, %v729
  %v733 = vrsqrt.pop %v698
  %v734 = vmul.f32 %v698, %v733
  %vm735 = vcmp.eq.f32.partialorder %v698, inf
  %v736 = vsel %vm735, %v698, %v734
  %vm737 = vcmp.eq.f32.partialorder %v698, 0.0
  %v738 = vand.u32 %v698, 2147483648
  %v739 = vsel %vm737, %v738, %v736
  %v740 = vrsqrt.pop %v699
  %v741 = vmul.f32 %v699, %v740
  %vm742 = vcmp.eq.f32.partialorder %v699, inf
  %v743 = vsel %vm742, %v699, %v741
  %vm744 = vcmp.eq.f32.partialorder %v699, 0.0
  %v745 = vand.u32 %v699, 2147483648
  %v746 = vsel %vm744, %v745, %v743
  %v747 = vrsqrt.pop %v700
  %v748 = vmul.f32 %v700, %v747
  %vm749 = vcmp.eq.f32.partialorder %v700, inf
  %v750 = vsel %vm749, %v700, %v748
  %vm751 = vcmp.eq.f32.partialorder %v700, 0.0
  %v752 = vand.u32 %v700, 2147483648
  %v753 = vsel %vm751, %v752, %v750
  %v754 = vrsqrt.pop %v701
  %v755 = vmul.f32 %v701, %v754
  %vm756 = vcmp.eq.f32.partialorder %v701, inf
  %v757 = vsel %vm756, %v701, %v755
  %vm758 = vcmp.eq.f32.partialorder %v701, 0.0
  %v759 = vand.u32 %v701, 2147483648
  %v760 = vsel %vm758, %v759, %v757
  %v761 = vrsqrt.pop %v702
  %v762 = vmul.f32 %v702, %v761
  %vm763 = vcmp.eq.f32.partialorder %v702, inf
  %v764 = vsel %vm763, %v702, %v762
  %vm765 = vcmp.eq.f32.partialorder %v702, 0.0
  %v766 = vand.u32 %v702, 2147483648
  %v767 = vsel %vm765, %v766, %v764
  %v768 = vrsqrt.pop %v703
  %v769 = vmul.f32 %v703, %v768
  %vm770 = vcmp.eq.f32.partialorder %v703, inf
  %v771 = vsel %vm770, %v703, %v769
  %vm772 = vcmp.eq.f32.partialorder %v703, 0.0
  %v773 = vand.u32 %v703, 2147483648
  %v774 = vsel %vm772, %v773, %v771
  %v775 = vrsqrt.pop %v704
  %v776 = vmul.f32 %v704, %v775
  %vm777 = vcmp.eq.f32.partialorder %v704, inf
  %v778 = vsel %vm777, %v704, %v776
  %vm779 = vcmp.eq.f32.partialorder %v704, 0.0
  %v780 = vand.u32 %v704, 2147483648
  %v781 = vsel %vm779, %v780, %v778
  %v782 = vrsqrt.pop %v705
  %v783 = vmul.f32 %v705, %v782
  %vm784 = vcmp.eq.f32.partialorder %v705, inf
  %v785 = vsel %vm784, %v705, %v783
  %vm786 = vcmp.eq.f32.partialorder %v705, 0.0
  %v787 = vand.u32 %v705, 2147483648
  %v788 = vsel %vm786, %v787, %v785
  %v789 = vrsqrt.pop %v706
  %v790 = vmul.f32 %v706, %v789
  %vm791 = vcmp.eq.f32.partialorder %v706, inf
  %v792 = vsel %vm791, %v706, %v790
  %vm793 = vcmp.eq.f32.partialorder %v706, 0.0
  %v794 = vand.u32 %v706, 2147483648
  %v795 = vsel %vm793, %v794, %v792
  %v796 = vrsqrt.pop %v707
  %v797 = vmul.f32 %v707, %v796
  %vm798 = vcmp.eq.f32.partialorder %v707, inf
  %v799 = vsel %vm798, %v707, %v797
  %vm800 = vcmp.eq.f32.partialorder %v707, 0.0
  %v801 = vand.u32 %v707, 2147483648
  %v802 = vsel %vm800, %v801, %v799
  %v803 = vrsqrt.pop %v708
  %v804 = vmul.f32 %v708, %v803
  %vm805 = vcmp.eq.f32.partialorder %v708, inf
  %v806 = vsel %vm805, %v708, %v804
  %vm807 = vcmp.eq.f32.partialorder %v708, 0.0
  %v808 = vand.u32 %v708, 2147483648
  %v809 = vsel %vm807, %v808, %v806
  %v810 = vrsqrt.pop %v709
  %v811 = vmul.f32 %v709, %v810
  %vm812 = vcmp.eq.f32.partialorder %v709, inf
  %v813 = vsel %vm812, %v709, %v811
  %vm814 = vcmp.eq.f32.partialorder %v709, 0.0
  %v815 = vand.u32 %v709, 2147483648
  %v816 = vsel %vm814, %v815, %v813
  %v817 = vrsqrt.pop %v710
  %v818 = vmul.f32 %v710, %v817
  %vm819 = vcmp.eq.f32.partialorder %v710, inf
  %v820 = vsel %vm819, %v710, %v818
  %vm821 = vcmp.eq.f32.partialorder %v710, 0.0
  %v822 = vand.u32 %v710, 2147483648
  %v823 = vsel %vm821, %v822, %v820
  %v824 = vrsqrt.pop %v711
  %v825 = vmul.f32 %v711, %v824
  %vm826 = vcmp.eq.f32.partialorder %v711, inf
  %v827 = vsel %vm826, %v711, %v825
  %vm828 = vcmp.eq.f32.partialorder %v711, 0.0
  %v829 = vand.u32 %v711, 2147483648
  %v830 = vsel %vm828, %v829, %v827
  %v831 = vsub.f32 %v548, %v718
  %v832 = vsub.f32 %v555, %v725
  %v833 = vsub.f32 %v562, %v732
  %v834 = vsub.f32 %v569, %v739
  %v835 = vsub.f32 %v576, %v746
  %v836 = vsub.f32 %v583, %v753
  %v837 = vsub.f32 %v590, %v760
  %v838 = vsub.f32 %v597, %v767
  %v839 = vsub.f32 %v604, %v774
  %v840 = vsub.f32 %v611, %v781
  %v841 = vsub.f32 %v618, %v788
  %v842 = vsub.f32 %v625, %v795
  %v843 = vsub.f32 %v632, %v802
  %v844 = vsub.f32 %v639, %v809
  %v845 = vsub.f32 %v646, %v816
  %v846 = vsub.f32 %v653, %v823
  %v847 = vsub.f32 %v660, %v830
  %v848 = vand.u32 2147483647, %v831
  %v849 = vand.u32 2147483647, %v832
  %v850 = vand.u32 2147483647, %v833
  %v851 = vand.u32 2147483647, %v834
  %v852 = vand.u32 2147483647, %v835
  %v853 = vand.u32 2147483647, %v836
  %v854 = vand.u32 2147483647, %v837
  %v855 = vand.u32 2147483647, %v838
  %v856 = vand.u32 2147483647, %v839
  %v857 = vand.u32 2147483647, %v840
  %v858 = vand.u32 2147483647, %v841
  %v859 = vand.u32 2147483647, %v842
  %v860 = vand.u32 2147483647, %v843
  %v861 = vand.u32 2147483647, %v844
  %v862 = vand.u32 2147483647, %v845
  %v863 = vand.u32 2147483647, %v846
  %v864 = vand.u32 2147483647, %v847
  %v865 = vadd.f32 %v548, 1e-07
  %v866 = vadd.f32 %v555, 1e-07
  %v867 = vadd.f32 %v562, 1e-07
  %v868 = vadd.f32 %v569, 1e-07
  %v869 = vadd.f32 %v576, 1e-07
  %v870 = vadd.f32 %v583, 1e-07
  %v871 = vadd.f32 %v590, 1e-07
  %v872 = vadd.f32 %v597, 1e-07
  %v873 = vadd.f32 %v604, 1e-07
  %v874 = vadd.f32 %v611, 1e-07
  %v875 = vadd.f32 %v618, 1e-07
  %v876 = vadd.f32 %v625, 1e-07
  %v877 = vadd.f32 %v632, 1e-07
  %v878 = vadd.f32 %v639, 1e-07
  %v879 = vadd.f32 %v646, 1e-07
  %v880 = vadd.f32 %v653, 1e-07
  %v881 = vadd.f32 %v660, 1e-07
  %v882 = vadd.f32 %v718, 1e-07
  %v883 = vadd.f32 %v725, 1e-07
  %v884 = vadd.f32 %v732, 1e-07
  %v885 = vadd.f32 %v739, 1e-07
  %v886 = vadd.f32 %v746, 1e-07
  %v887 = vadd.f32 %v753, 1e-07
  %v888 = vadd.f32 %v760, 1e-07
  %v889 = vadd.f32 %v767, 1e-07
  %v890 = vadd.f32 %v774, 1e-07
  %v891 = vadd.f32 %v781, 1e-07
  %v892 = vadd.f32 %v788, 1e-07
  %v893 = vadd.f32 %v795, 1e-07
  %v894 = vadd.f32 %v802, 1e-07
  %v895 = vadd.f32 %v809, 1e-07
  %v896 = vadd.f32 %v816, 1e-07
  %v897 = vadd.f32 %v823, 1e-07
  %v898 = vadd.f32 %v830, 1e-07
  %v899 = vrcp.pop %v882
  %v900 = vmul.f32 %v865, %v899
  %v901 = vrcp.pop %v883
  %v902 = vmul.f32 %v866, %v901
  %v903 = vrcp.pop %v884
  %v904 = vmul.f32 %v867, %v903
  %v905 = vrcp.pop %v885
  %v906 = vmul.f32 %v868, %v905
  %v907 = vrcp.pop %v886
  %v908 = vmul.f32 %v869, %v907
  %v909 = vrcp.pop %v887
  %v910 = vmul.f32 %v870, %v909
  %v911 = vrcp.pop %v888
  %v912 = vmul.f32 %v871, %v911
  %v913 = vrcp.pop %v889
  %v914 = vmul.f32 %v872, %v913
  %v915 = vrcp.pop %v890
  %v916 = vmul.f32 %v873, %v915
  %v917 = vrcp.pop %v891
  %v918 = vmul.f32 %v874, %v917
  %v919 = vrcp.pop %v892
  %v920 = vmul.f32 %v875, %v919
  %v921 = vrcp.pop %v893
  %v922 = vmul.f32 %v876, %v921
  %v923 = vrcp.pop %v894
  %v924 = vmul.f32 %v877, %v923
  %v925 = vrcp.pop %v895
  %v926 = vmul.f32 %v878, %v925
  %v927 = vrcp.pop %v896
  %v928 = vmul.f32 %v879, %v927
  %v929 = vrcp.pop %v897
  %v930 = vmul.f32 %v880, %v929
  %v931 = vrcp.pop %v898
  %v932 = vmul.f32 %v881, %v931
  %v933 = vlog2.pop %v900
  %v934 = vmul.f32 %v933, 0.6931472
  %v935 = vlog2.pop %v902
  %v936 = vmul.f32 %v935, 0.6931472
  %v937 = vlog2.pop %v904
  %v938 = vmul.f32 %v937, 0.6931472
  %v939 = vlog2.pop %v906
  %v940 = vmul.f32 %v939, 0.6931472
  %v941 = vlog2.pop %v908
  %v942 = vmul.f32 %v941, 0.6931472
  %v943 = vlog2.pop %v910
  %v944 = vmul.f32 %v943, 0.6931472
  %v945 = vlog2.pop %v912
  %v946 = vmul.f32 %v945, 0.6931472
  %v947 = vlog2.pop %v914
  %v948 = vmul.f32 %v947, 0.6931472
  %v949 = vlog2.pop %v916
  %v950 = vmul.f32 %v949, 0.6931472
  %v951 = vlog2.pop %v918
  %v952 = vmul.f32 %v951, 0.6931472
  %v953 = vlog2.pop %v920
  %v954 = vmul.f32 %v953, 0.6931472
  %v955 = vlog2.pop %v922
  %v956 = vmul.f32 %v955, 0.6931472
  %v957 = vlog2.pop %v924
  %v958 = vmul.f32 %v957, 0.6931472
  %v959 = vlog2.pop %v926
  %v960 = vmul.f32 %v959, 0.6931472
  %v961 = vlog2.pop %v928
  %v962 = vmul.f32 %v961, 0.6931472
  %v963 = vlog2.pop %v930
  %v964 = vmul.f32 %v963, 0.6931472
  %v965 = vlog2.pop %v932
  %v966 = vmul.f32 %v965, 0.6931472
  %v967 = vand.u32 2147483647, %v934
  %v968 = vand.u32 2147483647, %v936
  %v969 = vand.u32 2147483647, %v938
  %v970 = vand.u32 2147483647, %v940
  %v971 = vand.u32 2147483647, %v942
  %v972 = vand.u32 2147483647, %v944
  %v973 = vand.u32 2147483647, %v946
  %v974 = vand.u32 2147483647, %v948
  %v975 = vand.u32 2147483647, %v950
  %v976 = vand.u32 2147483647, %v952
  %v977 = vand.u32 2147483647, %v954
  %v978 = vand.u32 2147483647, %v956
  %v979 = vand.u32 2147483647, %v958
  %v980 = vand.u32 2147483647, %v960
  %v981 = vand.u32 2147483647, %v962
  %v982 = vand.u32 2147483647, %v964
  %v983 = vand.u32 2147483647, %v966
  %v984 = vadd.f32 %v848, %v849
  %v985 = vadd.f32 %v984, %v850
  %v986 = vadd.f32 %v985, %v851
  %v987 = vadd.f32 %v986, %v852
  %v988 = vadd.f32 %v987, %v853
  %v989 = vadd.f32 %v988, %v854
  %v990 = vadd.f32 %v989, %v855
  %v991 = vadd.f32 %v990, %v856
  %v992 = vadd.f32 %v991, %v857
  %v993 = vadd.f32 %v992, %v858
  %v994 = vadd.f32 %v993, %v859
  %v995 = vadd.f32 %v994, %v860
  %v996 = vadd.f32 %v995, %v861
  %v997 = vadd.f32 %v996, %v862
  %v998 = vadd.f32 %v997, %v863
  %v999 = vadd.f32 %v998, %v864
  %1000 = vst [vmem:[%s3] sm:$0xff] %v999
  %v1001 = vadd.f32 %v967, %v968
  %v1002 = vadd.f32 %v1001, %v969
  %v1003 = vadd.f32 %v1002, %v970
  %v1004 = vadd.f32 %v1003, %v971
  %v1005 = vadd.f32 %v1004, %v972
  %v1006 = vadd.f32 %v1005, %v973
  %v1007 = vadd.f32 %v1006, %v974
  %v1008 = vadd.f32 %v1007, %v975
  %v1009 = vadd.f32 %v1008, %v976
  %v1010 = vadd.f32 %v1009, %v977
  %v1011 = vadd.f32 %v1010, %v978
  %v1012 = vadd.f32 %v1011, %v979
  %v1013 = vadd.f32 %v1012, %v980
  %v1014 = vadd.f32 %v1013, %v981
  %v1015 = vadd.f32 %v1014, %v982
  %v1016 = vadd.f32 %v1015, %v983
  %1017 = vst [vmem:[%s4] sm:$0xff] %v1016
  // Predicated region
  $region14: #{_forward.5} parent=0 // pred_check
    _
  $region15: #{_forward.5} parent=0 // pred_check_branch
    %1019 = sbr.rel (0) target = $region17
  $region16: #{_forward.5} parent=0 // pred_region
    _
  $region17: #{_forward.5} parent=0 // pred_fallthru
    _
  // Predicated region
  $region18: #{_forward.5} parent=0 // pred_check
    _
  $region19: #{_forward.5} parent=0 // pred_check_branch
    %1021 = sbr.rel (0) target = $region21
  $region20: #{_forward.5} parent=0 // pred_region
    _
  $region21: #{_forward.5} parent=0 // pred_fallthru
    _
  // Predicated region
  $region22: #{_forward.5} parent=0 // pred_check
    _
  $region23: #{_forward.5} parent=0 // pred_check_branch
    %1023 = sbr.rel (0) target = $region25
  $region24: #{_forward.5} parent=0 // pred_region
    _
  $region25: #{_forward.5} parent=0 // pred_fallthru
    _
  // Predicated region
  $region26: #{_forward.5} parent=0 // pred_check
    _
  $region27: #{_forward.5} parent=0 // pred_check_branch
    %1025 = sbr.rel (0) target = $region29
  $region28: #{_forward.5} parent=0 // pred_region
    _
  $region29: #{_forward.5} parent=0 // pred_fallthru
    _

</llo_original>
